<compile_context>
chip_gen: v7x
topology: tpu7x:2x2x1
jax: 0.10.0
libtpu: 0.0.40
codegen_flags: <defaults>
</compile_context>

<pallas_src>
import math

import jax
import jax.numpy as jnp
from jax.experimental import pallas as pl
from jax.experimental.pallas import tpu as pltpu

# Model dimensions (features = cat([spa, spe]) must match the head's input dim,
# so backbone_dim = spa_dim + features_dim).
SPA_DIM       = 128                      # synthetic backbone output dim
FEATURES_DIM  = 128                      # features_dim
BACKBONE_DIM  = SPA_DIM + FEATURES_DIM   # 256, input dim of contrastive head
BACKBONE_DIM2 = 128                      # hidden dim of the mlp head
N_FEATURE     = 200                      # spectral feature dim (fc1 input)


def _gaussian_kernel(xf_ref, spe_x_ref,
                     wb_ref, bb_ref,
                     w1_ref, b1_ref,
                     wh1_ref, bh1_ref,
                     wh2_ref, bh2_ref,
                     feat_ref, out_ref):
    # ---- synthetic backbone: spa = relu(flatten(x) @ Wb + bb) --------------
    # f32 -> bf16 cast happens here (VPU, free vs. the HBM round trip it saves).
    spa = jnp.dot(xf_ref[...].astype(jnp.bfloat16),
                  wb_ref[...].astype(jnp.bfloat16),
                  preferred_element_type=jnp.float32)
    spa = jnp.maximum(spa + bb_ref[...], 0.0)

    # ---- spe = relu(fc1(spe_x))  (ragged K=200, padded in vregs for free) --
    spe = jnp.dot(spe_x_ref[...].astype(jnp.bfloat16),
                  w1_ref[...].astype(jnp.bfloat16),
                  preferred_element_type=jnp.float32)
    spe = jnp.maximum(spe + b1_ref[...], 0.0)

    # ---- contrastive_head (mlp) on [spa | spe] without a concat round trip:
    #      h = relu(spa @ wh1[:SPA] + spe @ wh1[SPA:] + bh1); o = h @ wh2 + bh2
    wh1 = wh1_ref[...].astype(jnp.bfloat16)
    h = (jnp.dot(spa.astype(jnp.bfloat16), wh1[:SPA_DIM, :],
                 preferred_element_type=jnp.float32)
         + jnp.dot(spe.astype(jnp.bfloat16), wh1[SPA_DIM:, :],
                   preferred_element_type=jnp.float32))
    h = jnp.maximum(h + bh1_ref[...], 0.0)
    o = jnp.dot(h.astype(jnp.bfloat16), wh2_ref[...].astype(jnp.bfloat16),
                preferred_element_type=jnp.float32) + bh2_ref[...]

    # ---- out = F.normalize(out, dim=-1) via rsqrt on the EUP ----------------
    # NOTE: eps is applied to the sum of squares (1e-24) instead of the norm
    # (1e-12) as torch does; equivalent at the clamp boundary.
    sumsq = jnp.sum(o * o, axis=-1, keepdims=True)
    out_ref[...] = (o * jax.lax.rsqrt(jnp.maximum(sumsq, 1e-24))).astype(out_ref.dtype)

    # ---- features = cat([spa, spe], dim=1), written once, off critical path
    feat_ref[:, :SPA_DIM] = spa.astype(feat_ref.dtype)
    feat_ref[:, SPA_DIM:] = spe.astype(feat_ref.dtype)


def _choose_tiling(B, flat_in, n_feature, vmem_budget_bytes):
    """Pick (tile_b, b_pad) from a VMEM budget, bounding the batch pad."""
    # Bytes in flight per batch row:
    #   xf f32 double-buffered + its in-kernel bf16 copy, spe f32 double-buffered,
    #   both f32 outputs double-buffered, plus activation scratch.
    row_bytes = (2 * flat_in * 4
                 + flat_in * 2
                 + 2 * n_feature * 4
                 + 2 * (BACKBONE_DIM + FEATURES_DIM) * 4
                 + (SPA_DIM + FEATURES_DIM + BACKBONE_DIM2 + FEATURES_DIM) * 4)
    # VMEM-resident weights (constant index maps, single-buffered) + biases.
    weight_bytes = ((flat_in + n_feature + BACKBONE_DIM + BACKBONE_DIM2) * 128 * 4
                    + 4 * 128 * 4)
    avail = max(vmem_budget_bytes - weight_bytes, 64 * 1024)
    target = max(8, min(2048, (avail // row_bytes) // 8 * 8))
    n_tiles = -(-B // target)                       # number of batch tiles first ...
    tile_b = ((-(-B // n_tiles)) + 7) // 8 * 8      # ... then the per-tile size,
    b_pad = n_tiles * tile_b                        # so the pad stays small.
    return tile_b, b_pad, row_bytes, weight_bytes


def gaussian_model_forward(x, spe_x, i, params, *,
                           vmem_budget_bytes=20 * 1024 * 1024):
    """Returns (features, out) matching the PyTorch module's forward."""
    del i  # TODO(synk): backbone index argument has no effect in the synthetic backbone
    B = x.shape[0]
    flat_in = math.prod(x.shape[1:])
    n_feature = spe_x.shape[1]

    xf = x.reshape(B, flat_in)                      # stays f32; cast is in-kernel
    tile_b, b_pad, row_bytes, weight_bytes = _choose_tiling(
        B, flat_in, n_feature, vmem_budget_bytes)
    if b_pad != B:
        xf = jnp.pad(xf, ((0, b_pad - B), (0, 0)))
        spe_x = jnp.pad(spe_x, ((0, b_pad - B), (0, 0)))

    wb, bb = params["wb"], params["bb"]
    w1, b1 = params["w1"], params["b1"]
    wh1, bh1 = params["wh1"], params["bh1"]
    wh2, bh2 = params["wh2"], params["bh2"]

    grid = (b_pad // tile_b,)

    def row_spec(feat):                             # batch-tiled arrays
        return pl.BlockSpec((tile_b, feat), lambda b: (b, 0))

    def const_spec(shape, single_buffer):           # VMEM-resident weights / biases
        if single_buffer:
            return pl.BlockSpec(shape, lambda b: (0, 0),
                                pipeline_mode=pl.Buffered(1))
        return pl.BlockSpec(shape, lambda b: (0, 0))

    flops = 2 * b_pad * (flat_in * SPA_DIM
                         + n_feature * FEATURES_DIM
                         + BACKBONE_DIM * BACKBONE_DIM2
                         + BACKBONE_DIM2 * FEATURES_DIM)
    bytes_accessed = 4 * (xf.size + spe_x.size
                          + wb.size + w1.size + wh1.size + wh2.size
                          + bb.size + b1.size + bh1.size + bh2.size
                          + b_pad * BACKBONE_DIM + b_pad * FEATURES_DIM)

    # Explicit scoped-VMEM limit: v5e defaults to 16 MiB, v6e/v7x to 32 MiB;
    # keep below v7x's 64 MiB physical VMEM.
    vmem_est = tile_b * row_bytes + weight_bytes
    vmem_limit = int(min(max(int(vmem_est * 1.5), 32 * 1024 * 1024),
                         56 * 1024 * 1024))

    def build(single_buffer_consts):
        return pl.pallas_call(
            _gaussian_kernel,
            out_shape=(jax.ShapeDtypeStruct((b_pad, BACKBONE_DIM), jnp.float32),
                       jax.ShapeDtypeStruct((b_pad, FEATURES_DIM), jnp.float32)),
            grid=grid,
            in_specs=[row_spec(flat_in),            # xf (f32)
                      row_spec(n_feature)]          # spe_x (f32, 200 cols, no pad)
                     + [const_spec(w.shape, single_buffer_consts)
                        for w in (wb, bb, w1, b1, wh1, bh1, wh2, bh2)],
            out_specs=(row_spec(BACKBONE_DIM), row_spec(FEATURES_DIM)),
            compiler_params=pltpu.CompilerParams(
                dimension_semantics=("parallel",),
                vmem_limit_bytes=vmem_limit),
            cost_estimate=pl.CostEstimate(
                flops=flops, transcendentals=b_pad,
                bytes_accessed=bytes_accessed),
        )

    args = (xf, spe_x, wb, bb, w1, b1, wh1, bh1, wh2, bh2)
    try:
        features, out = build(True)(*args)
    except Exception:
        # TODO(synk): Buffered(1) single-buffering of constant blocks is not
        # supported by this JAX build; fall back to default double-buffering.
        features, out = build(False)(*args)

    if b_pad != B:
        features = features[:B]
        out = out[:B]
    return features, out


def init_params(key, flat_in_dim):
    """Deterministic synthetic parameter init (weights stored as (in, out))."""
    ks = jax.random.split(key, 10)

    def lin(kw, kb, din, dout):
        scale = 1.0 / jnp.sqrt(jnp.float32(din))
        w = jax.random.normal(kw, (din, dout), jnp.float32) * scale
        b = jax.random.normal(kb, (1, dout), jnp.float32) * 0.01
        return w, b

    wb,  bb  = lin(ks[0], ks[1], flat_in_dim,   SPA_DIM)        # backbone linear
    w1,  b1  = lin(ks[2], ks[3], N_FEATURE,     FEATURES_DIM)   # fc1
    wh1, bh1 = lin(ks[4], ks[5], BACKBONE_DIM,  BACKBONE_DIM2)  # head linear 1
    wh2, bh2 = lin(ks[6], ks[7], BACKBONE_DIM2, FEATURES_DIM)   # head linear 2
    return {"wb": wb, "bb": bb, "w1": w1, "b1": b1,
            "wh1": wh1, "bh1": bh1, "wh2": wh2, "bh2": bh2}


def _reference(x, spe_x, params):
    """Pure-JAX reference with the same bf16 operand quantization as the kernel."""
    B = x.shape[0]
    q = lambda a: a.astype(jnp.bfloat16).astype(jnp.float32)
    xf = q(x.reshape(B, -1))
    spa = jnp.maximum(xf @ q(params["wb"]) + params["bb"], 0.0)
    spe = jnp.maximum(q(spe_x) @ q(params["w1"]) + params["b1"], 0.0)
    features = jnp.concatenate([spa, spe], axis=1)
    h = jnp.maximum(q(features) @ q(params["wh1"]) + params["bh1"], 0.0)
    o = q(h) @ q(params["wh2"]) + params["bh2"]
    norm = jnp.sqrt(jnp.sum(o * o, axis=-1, keepdims=True))
    return features, o / jnp.maximum(norm, 1e-12)


if __name__ == "__main__":
    key = jax.random.PRNGKey(0)
    k_x, k_spe, k_params = jax.random.split(key, 3)

    B, C, H, W = 8, 4, 16, 16
    x = jax.random.normal(k_x, (B, C, H, W), jnp.float32)        # NCHW, like PyTorch
    spe_x = jax.random.normal(k_spe, (B, N_FEATURE), jnp.float32)
    i = 0

    params = init_params(k_params, C * H * W)

    features, out = gaussian_model_forward(x, spe_x, i, params)
    features = jax.block_until_ready(features)
    out = jax.block_until_ready(out)

    feat_ref, out_ref = _reference(x, spe_x, params)
    assert features.shape == (B, BACKBONE_DIM) and out.shape == (B, FEATURES_DIM)
    assert jnp.allclose(features, feat_ref, atol=2e-2, rtol=2e-2)
    assert jnp.allclose(out, out_ref, atol=2e-2, rtol=2e-2)
    # outputs are L2-normalized rows
    assert jnp.allclose(jnp.sum(out * out, axis=-1), 1.0, atol=1e-3)

    print("KERNEL_OK")
</pallas_src>

<mosaic_0001>
module attributes {stable_mosaic.version = 11 : i64} {
  func.func @_gaussian_kernel(%arg0: i32, %arg1: memref<8x1024xf32, #tpu.memory_space<vmem>>, %arg2: memref<8x200xf32, #tpu.memory_space<vmem>>, %arg3: memref<1024x128xf32, #tpu.memory_space<vmem>>, %arg4: memref<1x128xf32, #tpu.memory_space<vmem>>, %arg5: memref<200x128xf32, #tpu.memory_space<vmem>>, %arg6: memref<1x128xf32, #tpu.memory_space<vmem>>, %arg7: memref<256x128xf32, #tpu.memory_space<vmem>>, %arg8: memref<1x128xf32, #tpu.memory_space<vmem>>, %arg9: memref<128x128xf32, #tpu.memory_space<vmem>>, %arg10: memref<1x128xf32, #tpu.memory_space<vmem>>, %arg11: memref<8x256xf32, #tpu.memory_space<vmem>>, %arg12: memref<8x128xf32, #tpu.memory_space<vmem>>) attributes {dimension_semantics = [#tpu.dimension_semantics<parallel>], iteration_bounds = array<i64: 1>, scalar_prefetch = 0 : i64, scratch_operands = 0 : i64, tpu.core_type = #tpu.core_type<tc>, window_params = [{transform_indices = @transform_0, window_bounds = array<i64: 8, 1024>}, {transform_indices = @transform_1, window_bounds = array<i64: 8, 200>}, {pipeline_mode = #tpu.pipeline_mode<synchronous>, transform_indices = @transform_2, window_bounds = array<i64: 1024, 128>}, {pipeline_mode = #tpu.pipeline_mode<synchronous>, transform_indices = @transform_3, window_bounds = array<i64: 1, 128>}, {pipeline_mode = #tpu.pipeline_mode<synchronous>, transform_indices = @transform_4, window_bounds = array<i64: 200, 128>}, {pipeline_mode = #tpu.pipeline_mode<synchronous>, transform_indices = @transform_5, window_bounds = array<i64: 1, 128>}, {pipeline_mode = #tpu.pipeline_mode<synchronous>, transform_indices = @transform_6, window_bounds = array<i64: 256, 128>}, {pipeline_mode = #tpu.pipeline_mode<synchronous>, transform_indices = @transform_7, window_bounds = array<i64: 1, 128>}, {pipeline_mode = #tpu.pipeline_mode<synchronous>, transform_indices = @transform_8, window_bounds = array<i64: 128, 128>}, {pipeline_mode = #tpu.pipeline_mode<synchronous>, transform_indices = @transform_9, window_bounds = array<i64: 1, 128>}, {transform_indices = @transform_10, window_bounds = array<i64: 8, 256>}, {transform_indices = @transform_11, window_bounds = array<i64: 8, 128>}]} {
    %c0 = arith.constant 0 : index
    %c0_0 = arith.constant 0 : index
    %0 = vector.load %arg1[%c0, %c0_0] : memref<8x1024xf32, #tpu.memory_space<vmem>>, vector<8x1024xf32>
    %1 = arith.truncf %0 : vector<8x1024xf32> to vector<8x1024xbf16>
    %c0_1 = arith.constant 0 : index
    %c0_2 = arith.constant 0 : index
    %2 = vector.load %arg3[%c0_1, %c0_2] : memref<1024x128xf32, #tpu.memory_space<vmem>>, vector<1024x128xf32>
    %3 = arith.truncf %2 : vector<1024x128xf32> to vector<1024x128xbf16>
    %cst = arith.constant dense<0.000000e+00> : vector<8x128xf32>
    %4 = tpu.matmul %1, %3, %cst {dimension_numbers = #tpu.dot_dimension_numbers<[1], [0], [0], [1], [0, 0, 1, 1], [], []>} : vector<8x1024xbf16>, vector<1024x128xbf16>, vector<8x128xf32> -> vector<8x128xf32>
    %c0_3 = arith.constant 0 : index
    %c0_4 = arith.constant 0 : index
    %5 = vector.load %arg4[%c0_3, %c0_4] : memref<1x128xf32, #tpu.memory_space<vmem>>, vector<1x128xf32>
    %6 = vector.broadcast %5 : vector<1x128xf32> to vector<8x128xf32>
    %7 = arith.addf %4, %6 : vector<8x128xf32>
    %cst_5 = arith.constant 0.000000e+00 : f32
    %8 = vector.broadcast %cst_5 : f32 to vector<8x128xf32>
    %9 = arith.maximumf %7, %8 : vector<8x128xf32>
    %c0_6 = arith.constant 0 : index
    %c0_7 = arith.constant 0 : index
    %10 = vector.load %arg2[%c0_6, %c0_7] : memref<8x200xf32, #tpu.memory_space<vmem>>, vector<8x200xf32>
    %11 = arith.truncf %10 : vector<8x200xf32> to vector<8x200xbf16>
    %c0_8 = arith.constant 0 : index
    %c0_9 = arith.constant 0 : index
    %12 = vector.load %arg5[%c0_8, %c0_9] : memref<200x128xf32, #tpu.memory_space<vmem>>, vector<200x128xf32>
    %13 = arith.truncf %12 : vector<200x128xf32> to vector<200x128xbf16>
    %cst_10 = arith.constant dense<0.000000e+00> : vector<8x128xf32>
    %14 = tpu.matmul %11, %13, %cst_10 {dimension_numbers = #tpu.dot_dimension_numbers<[1], [0], [0], [1], [0, 0, 1, 1], [], []>} : vector<8x200xbf16>, vector<200x128xbf16>, vector<8x128xf32> -> vector<8x128xf32>
    %c0_11 = arith.constant 0 : index
    %c0_12 = arith.constant 0 : index
    %15 = vector.load %arg6[%c0_11, %c0_12] : memref<1x128xf32, #tpu.memory_space<vmem>>, vector<1x128xf32>
    %16 = vector.broadcast %15 : vector<1x128xf32> to vector<8x128xf32>
    %17 = arith.addf %14, %16 : vector<8x128xf32>
    %cst_13 = arith.constant 0.000000e+00 : f32
    %18 = vector.broadcast %cst_13 : f32 to vector<8x128xf32>
    %19 = arith.maximumf %17, %18 : vector<8x128xf32>
    %c0_14 = arith.constant 0 : index
    %c0_15 = arith.constant 0 : index
    %20 = vector.load %arg7[%c0_14, %c0_15] : memref<256x128xf32, #tpu.memory_space<vmem>>, vector<256x128xf32>
    %21 = arith.truncf %20 : vector<256x128xf32> to vector<256x128xbf16>
    %22 = arith.truncf %9 : vector<8x128xf32> to vector<8x128xbf16>
    %23 = vector.extract_strided_slice %21 {offsets = [0, 0], sizes = [128, 128], strides = [1, 1]} : vector<256x128xbf16> to vector<128x128xbf16>
    %cst_16 = arith.constant dense<0.000000e+00> : vector<8x128xf32>
    %24 = tpu.matmul %22, %23, %cst_16 {dimension_numbers = #tpu.dot_dimension_numbers<[1], [0], [0], [1], [0, 0, 1, 1], [], []>} : vector<8x128xbf16>, vector<128x128xbf16>, vector<8x128xf32> -> vector<8x128xf32>
    %25 = arith.truncf %19 : vector<8x128xf32> to vector<8x128xbf16>
    %26 = vector.extract_strided_slice %21 {offsets = [128, 0], sizes = [128, 128], strides = [1, 1]} : vector<256x128xbf16> to vector<128x128xbf16>
    %cst_17 = arith.constant dense<0.000000e+00> : vector<8x128xf32>
    %27 = tpu.matmul %25, %26, %cst_17 {dimension_numbers = #tpu.dot_dimension_numbers<[1], [0], [0], [1], [0, 0, 1, 1], [], []>} : vector<8x128xbf16>, vector<128x128xbf16>, vector<8x128xf32> -> vector<8x128xf32>
    %28 = arith.addf %24, %27 : vector<8x128xf32>
    %c0_18 = arith.constant 0 : index
    %c0_19 = arith.constant 0 : index
    %29 = vector.load %arg8[%c0_18, %c0_19] : memref<1x128xf32, #tpu.memory_space<vmem>>, vector<1x128xf32>
    %30 = vector.broadcast %29 : vector<1x128xf32> to vector<8x128xf32>
    %31 = arith.addf %28, %30 : vector<8x128xf32>
    %cst_20 = arith.constant 0.000000e+00 : f32
    %32 = vector.broadcast %cst_20 : f32 to vector<8x128xf32>
    %33 = arith.maximumf %31, %32 : vector<8x128xf32>
    %34 = arith.truncf %33 : vector<8x128xf32> to vector<8x128xbf16>
    %c0_21 = arith.constant 0 : index
    %c0_22 = arith.constant 0 : index
    %35 = vector.load %arg9[%c0_21, %c0_22] : memref<128x128xf32, #tpu.memory_space<vmem>>, vector<128x128xf32>
    %36 = arith.truncf %35 : vector<128x128xf32> to vector<128x128xbf16>
    %cst_23 = arith.constant dense<0.000000e+00> : vector<8x128xf32>
    %37 = tpu.matmul %34, %36, %cst_23 {dimension_numbers = #tpu.dot_dimension_numbers<[1], [0], [0], [1], [0, 0, 1, 1], [], []>} : vector<8x128xbf16>, vector<128x128xbf16>, vector<8x128xf32> -> vector<8x128xf32>
    %c0_24 = arith.constant 0 : index
    %c0_25 = arith.constant 0 : index
    %38 = vector.load %arg10[%c0_24, %c0_25] : memref<1x128xf32, #tpu.memory_space<vmem>>, vector<1x128xf32>
    %39 = vector.broadcast %38 : vector<1x128xf32> to vector<8x128xf32>
    %40 = arith.addf %37, %39 : vector<8x128xf32>
    %41 = arith.mulf %40, %40 : vector<8x128xf32>
    %cst_26 = arith.constant dense<0.000000e+00> : vector<8xf32>
    %42 = vector.multi_reduction <add>, %41, %cst_26 [1] : vector<8x128xf32> to vector<8xf32>
    %43 = vector.shape_cast %42 : vector<8xf32> to vector<8x1xf32>
    %cst_27 = arith.constant 1.000000e-24 : f32
    %44 = vector.broadcast %cst_27 : f32 to vector<8x1xf32>
    %45 = arith.maximumf %43, %44 : vector<8x1xf32>
    %46 = math.rsqrt %45 : vector<8x1xf32>
    %47 = vector.broadcast %46 : vector<8x1xf32> to vector<8x128xf32>
    %48 = arith.mulf %40, %47 : vector<8x128xf32>
    %c0_28 = arith.constant 0 : index
    %c0_29 = arith.constant 0 : index
    %49 = vector.load %arg12[%c0_28, %c0_29] : memref<8x128xf32, #tpu.memory_space<vmem>>, vector<8x128xf32>
    tpu.vector_store %arg12[%c0_28, %c0_29], %48 {strides = array<i32>} : memref<8x128xf32, #tpu.memory_space<vmem>>, vector<8x128xf32>,
    %c0_30 = arith.constant 0 : index
    %c0_31 = arith.constant 0 : index
    %50 = vector.load %arg11[%c0_30, %c0_31] : memref<8x256xf32, #tpu.memory_space<vmem>>, vector<8x128xf32>
    tpu.vector_store %arg11[%c0_30, %c0_31], %9 {strides = array<i32>} : memref<8x256xf32, #tpu.memory_space<vmem>>, vector<8x128xf32>,
    %c0_32 = arith.constant 0 : index
    %c128 = arith.constant 128 : index
    %51 = vector.load %arg11[%c0_32, %c128] : memref<8x256xf32, #tpu.memory_space<vmem>>, vector<8x128xf32>
    tpu.vector_store %arg11[%c0_32, %c128], %19 {strides = array<i32>} : memref<8x256xf32, #tpu.memory_space<vmem>>, vector<8x128xf32>,
    return
  }
  func.func @transform_0(%arg0: i32) -> (i32, i32) {
    %c0_i32 = arith.constant 0 : i32
    %c0_i32_0 = arith.constant 0 : i32
    return %arg0, %c0_i32 : i32, i32
  }
  func.func @transform_1(%arg0: i32) -> (i32, i32) {
    %c0_i32 = arith.constant 0 : i32
    %c0_i32_0 = arith.constant 0 : i32
    return %arg0, %c0_i32 : i32, i32
  }
  func.func @transform_2(%arg0: i32) -> (i32, i32) {
    %c0_i32 = arith.constant 0 : i32
    %c0_i32_0 = arith.constant 0 : i32
    %c0_i32_1 = arith.constant 0 : i32
    return %c0_i32, %c0_i32_0 : i32, i32
  }
  func.func @transform_3(%arg0: i32) -> (i32, i32) {
    %c0_i32 = arith.constant 0 : i32
    %c0_i32_0 = arith.constant 0 : i32
    %c0_i32_1 = arith.constant 0 : i32
    return %c0_i32, %c0_i32_0 : i32, i32
  }
  func.func @transform_4(%arg0: i32) -> (i32, i32) {
    %c0_i32 = arith.constant 0 : i32
    %c0_i32_0 = arith.constant 0 : i32
    %c0_i32_1 = arith.constant 0 : i32
    return %c0_i32, %c0_i32_0 : i32, i32
  }
  func.func @transform_5(%arg0: i32) -> (i32, i32) {
    %c0_i32 = arith.constant 0 : i32
    %c0_i32_0 = arith.constant 0 : i32
    %c0_i32_1 = arith.constant 0 : i32
    return %c0_i32, %c0_i32_0 : i32, i32
  }
  func.func @transform_6(%arg0: i32) -> (i32, i32) {
    %c0_i32 = arith.constant 0 : i32
    %c0_i32_0 = arith.constant 0 : i32
    %c0_i32_1 = arith.constant 0 : i32
    return %c0_i32, %c0_i32_0 : i32, i32
  }
  func.func @transform_7(%arg0: i32) -> (i32, i32) {
    %c0_i32 = arith.constant 0 : i32
    %c0_i32_0 = arith.constant 0 : i32
    %c0_i32_1 = arith.constant 0 : i32
    return %c0_i32, %c0_i32_0 : i32, i32
  }
  func.func @transform_8(%arg0: i32) -> (i32, i32) {
    %c0_i32 = arith.constant 0 : i32
    %c0_i32_0 = arith.constant 0 : i32
    %c0_i32_1 = arith.constant 0 : i32
    return %c0_i32, %c0_i32_0 : i32, i32
  }
  func.func @transform_9(%arg0: i32) -> (i32, i32) {
    %c0_i32 = arith.constant 0 : i32
    %c0_i32_0 = arith.constant 0 : i32
    %c0_i32_1 = arith.constant 0 : i32
    return %c0_i32, %c0_i32_0 : i32, i32
  }
  func.func @transform_10(%arg0: i32) -> (i32, i32) {
    %c0_i32 = arith.constant 0 : i32
    %c0_i32_0 = arith.constant 0 : i32
    return %arg0, %c0_i32 : i32, i32
  }
  func.func @transform_11(%arg0: i32) -> (i32, i32) {
    %c0_i32 = arith.constant 0 : i32
    %c0_i32_0 = arith.constant 0 : i32
    return %arg0, %c0_i32 : i32, i32
  }
}

module attributes {stable_mosaic.version = 11 : i64} {
  func.func @_gaussian_kernel(%arg0: i32, %arg1: memref<8x1024xf32, #tpu.memory_space<vmem>>, %arg2: memref<8x200xf32, #tpu.memory_space<vmem>>, %arg3: memref<1024x128xf32, #tpu.memory_space<vmem>>, %arg4: memref<1x128xf32, #tpu.memory_space<vmem>>, %arg5: memref<200x128xf32, #tpu.memory_space<vmem>>, %arg6: memref<1x128xf32, #tpu.memory_space<vmem>>, %arg7: memref<256x128xf32, #tpu.memory_space<vmem>>, %arg8: memref<1x128xf32, #tpu.memory_space<vmem>>, %arg9: memref<128x128xf32, #tpu.memory_space<vmem>>, %arg10: memref<1x128xf32, #tpu.memory_space<vmem>>, %arg11: memref<8x256xf32, #tpu.memory_space<vmem>>, %arg12: memref<8x128xf32, #tpu.memory_space<vmem>>) attributes {dimension_semantics = [#tpu.dimension_semantics<parallel>], iteration_bounds = array<i64: 1>, scalar_prefetch = 0 : i64, scratch_operands = 0 : i64, tpu.core_type = #tpu.core_type<tc>, window_params = [{transform_indices = @transform_0, window_bounds = array<i64: 8, 1024>}, {transform_indices = @transform_1, window_bounds = array<i64: 8, 200>}, {pipeline_mode = #tpu.pipeline_mode<synchronous>, transform_indices = @transform_2, window_bounds = array<i64: 1024, 128>}, {pipeline_mode = #tpu.pipeline_mode<synchronous>, transform_indices = @transform_3, window_bounds = array<i64: 1, 128>}, {pipeline_mode = #tpu.pipeline_mode<synchronous>, transform_indices = @transform_4, window_bounds = array<i64: 200, 128>}, {pipeline_mode = #tpu.pipeline_mode<synchronous>, transform_indices = @transform_5, window_bounds = array<i64: 1, 128>}, {pipeline_mode = #tpu.pipeline_mode<synchronous>, transform_indices = @transform_6, window_bounds = array<i64: 256, 128>}, {pipeline_mode = #tpu.pipeline_mode<synchronous>, transform_indices = @transform_7, window_bounds = array<i64: 1, 128>}, {pipeline_mode = #tpu.pipeline_mode<synchronous>, transform_indices = @transform_8, window_bounds = array<i64: 128, 128>}, {pipeline_mode = #tpu.pipeline_mode<synchronous>, transform_indices = @transform_9, window_bounds = array<i64: 1, 128>}, {transform_indices = @transform_10, window_bounds = array<i64: 8, 256>}, {transform_indices = @transform_11, window_bounds = array<i64: 8, 128>}]} {
    %c0 = arith.constant 0 : index
    %c0_0 = arith.constant 0 : index
    %0 = vector.load %arg1[%c0, %c0_0] : memref<8x1024xf32, #tpu.memory_space<vmem>>, vector<8x1024xf32>
    %1 = arith.truncf %0 : vector<8x1024xf32> to vector<8x1024xbf16>
    %c0_1 = arith.constant 0 : index
    %c0_2 = arith.constant 0 : index
    %2 = vector.load %arg3[%c0_1, %c0_2] : memref<1024x128xf32, #tpu.memory_space<vmem>>, vector<1024x128xf32>
    %3 = arith.truncf %2 : vector<1024x128xf32> to vector<1024x128xbf16>
    %cst = arith.constant dense<0.000000e+00> : vector<8x128xf32>
    %4 = tpu.matmul %1, %3, %cst {dimension_numbers = #tpu.dot_dimension_numbers<[1], [0], [0], [1], [0, 0, 1, 1], [], []>} : vector<8x1024xbf16>, vector<1024x128xbf16>, vector<8x128xf32> -> vector<8x128xf32>
    %c0_3 = arith.constant 0 : index
    %c0_4 = arith.constant 0 : index
    %5 = vector.load %arg4[%c0_3, %c0_4] : memref<1x128xf32, #tpu.memory_space<vmem>>, vector<1x128xf32>
    %6 = vector.broadcast %5 : vector<1x128xf32> to vector<8x128xf32>
    %7 = arith.addf %4, %6 : vector<8x128xf32>
    %cst_5 = arith.constant 0.000000e+00 : f32
    %8 = vector.broadcast %cst_5 : f32 to vector<8x128xf32>
    %9 = arith.maximumf %7, %8 : vector<8x128xf32>
    %c0_6 = arith.constant 0 : index
    %c0_7 = arith.constant 0 : index
    %10 = vector.load %arg2[%c0_6, %c0_7] : memref<8x200xf32, #tpu.memory_space<vmem>>, vector<8x200xf32>
    %11 = arith.truncf %10 : vector<8x200xf32> to vector<8x200xbf16>
    %c0_8 = arith.constant 0 : index
    %c0_9 = arith.constant 0 : index
    %12 = vector.load %arg5[%c0_8, %c0_9] : memref<200x128xf32, #tpu.memory_space<vmem>>, vector<200x128xf32>
    %13 = arith.truncf %12 : vector<200x128xf32> to vector<200x128xbf16>
    %cst_10 = arith.constant dense<0.000000e+00> : vector<8x128xf32>
    %14 = tpu.matmul %11, %13, %cst_10 {dimension_numbers = #tpu.dot_dimension_numbers<[1], [0], [0], [1], [0, 0, 1, 1], [], []>} : vector<8x200xbf16>, vector<200x128xbf16>, vector<8x128xf32> -> vector<8x128xf32>
    %c0_11 = arith.constant 0 : index
    %c0_12 = arith.constant 0 : index
    %15 = vector.load %arg6[%c0_11, %c0_12] : memref<1x128xf32, #tpu.memory_space<vmem>>, vector<1x128xf32>
    %16 = vector.broadcast %15 : vector<1x128xf32> to vector<8x128xf32>
    %17 = arith.addf %14, %16 : vector<8x128xf32>
    %cst_13 = arith.constant 0.000000e+00 : f32
    %18 = vector.broadcast %cst_13 : f32 to vector<8x128xf32>
    %19 = arith.maximumf %17, %18 : vector<8x128xf32>
    %c0_14 = arith.constant 0 : index
    %c0_15 = arith.constant 0 : index
    %20 = vector.load %arg7[%c0_14, %c0_15] : memref<256x128xf32, #tpu.memory_space<vmem>>, vector<256x128xf32>
    %21 = arith.truncf %20 : vector<256x128xf32> to vector<256x128xbf16>
    %22 = arith.truncf %9 : vector<8x128xf32> to vector<8x128xbf16>
    %23 = vector.extract_strided_slice %21 {offsets = [0, 0], sizes = [128, 128], strides = [1, 1]} : vector<256x128xbf16> to vector<128x128xbf16>
    %cst_16 = arith.constant dense<0.000000e+00> : vector<8x128xf32>
    %24 = tpu.matmul %22, %23, %cst_16 {dimension_numbers = #tpu.dot_dimension_numbers<[1], [0], [0], [1], [0, 0, 1, 1], [], []>} : vector<8x128xbf16>, vector<128x128xbf16>, vector<8x128xf32> -> vector<8x128xf32>
    %25 = arith.truncf %19 : vector<8x128xf32> to vector<8x128xbf16>
    %26 = vector.extract_strided_slice %21 {offsets = [128, 0], sizes = [128, 128], strides = [1, 1]} : vector<256x128xbf16> to vector<128x128xbf16>
    %cst_17 = arith.constant dense<0.000000e+00> : vector<8x128xf32>
    %27 = tpu.matmul %25, %26, %cst_17 {dimension_numbers = #tpu.dot_dimension_numbers<[1], [0], [0], [1], [0, 0, 1, 1], [], []>} : vector<8x128xbf16>, vector<128x128xbf16>, vector<8x128xf32> -> vector<8x128xf32>
    %28 = arith.addf %24, %27 : vector<8x128xf32>
    %c0_18 = arith.constant 0 : index
    %c0_19 = arith.constant 0 : index
    %29 = vector.load %arg8[%c0_18, %c0_19] : memref<1x128xf32, #tpu.memory_space<vmem>>, vector<1x128xf32>
    %30 = vector.broadcast %29 : vector<1x128xf32> to vector<8x128xf32>
    %31 = arith.addf %28, %30 : vector<8x128xf32>
    %cst_20 = arith.constant 0.000000e+00 : f32
    %32 = vector.broadcast %cst_20 : f32 to vector<8x128xf32>
    %33 = arith.maximumf %31, %32 : vector<8x128xf32>
    %34 = arith.truncf %33 : vector<8x128xf32> to vector<8x128xbf16>
    %c0_21 = arith.constant 0 : index
    %c0_22 = arith.constant 0 : index
    %35 = vector.load %arg9[%c0_21, %c0_22] : memref<128x128xf32, #tpu.memory_space<vmem>>, vector<128x128xf32>
    %36 = arith.truncf %35 : vector<128x128xf32> to vector<128x128xbf16>
    %cst_23 = arith.constant dense<0.000000e+00> : vector<8x128xf32>
    %37 = tpu.matmul %34, %36, %cst_23 {dimension_numbers = #tpu.dot_dimension_numbers<[1], [0], [0], [1], [0, 0, 1, 1], [], []>} : vector<8x128xbf16>, vector<128x128xbf16>, vector<8x128xf32> -> vector<8x128xf32>
    %c0_24 = arith.constant 0 : index
    %c0_25 = arith.constant 0 : index
    %38 = vector.load %arg10[%c0_24, %c0_25] : memref<1x128xf32, #tpu.memory_space<vmem>>, vector<1x128xf32>
    %39 = vector.broadcast %38 : vector<1x128xf32> to vector<8x128xf32>
    %40 = arith.addf %37, %39 : vector<8x128xf32>
    %41 = arith.mulf %40, %40 : vector<8x128xf32>
    %cst_26 = arith.constant dense<0.000000e+00> : vector<8xf32>
    %42 = vector.multi_reduction <add>, %41, %cst_26 [1] : vector<8x128xf32> to vector<8xf32>
    %43 = vector.shape_cast %42 : vector<8xf32> to vector<8x1xf32>
    %cst_27 = arith.constant 1.000000e-24 : f32
    %44 = vector.broadcast %cst_27 : f32 to vector<8x1xf32>
    %45 = arith.maximumf %43, %44 : vector<8x1xf32>
    %46 = math.rsqrt %45 : vector<8x1xf32>
    %47 = vector.broadcast %46 : vector<8x1xf32> to vector<8x128xf32>
    %48 = arith.mulf %40, %47 : vector<8x128xf32>
    %c0_28 = arith.constant 0 : index
    %c0_29 = arith.constant 0 : index
    %49 = vector.load %arg12[%c0_28, %c0_29] : memref<8x128xf32, #tpu.memory_space<vmem>>, vector<8x128xf32>
    tpu.vector_store %arg12[%c0_28, %c0_29], %48 {strides = array<i32>} : memref<8x128xf32, #tpu.memory_space<vmem>>, vector<8x128xf32>,
    %c0_30 = arith.constant 0 : index
    %c0_31 = arith.constant 0 : index
    %50 = vector.load %arg11[%c0_30, %c0_31] : memref<8x256xf32, #tpu.memory_space<vmem>>, vector<8x128xf32>
    tpu.vector_store %arg11[%c0_30, %c0_31], %9 {strides = array<i32>} : memref<8x256xf32, #tpu.memory_space<vmem>>, vector<8x128xf32>,
    %c0_32 = arith.constant 0 : index
    %c128 = arith.constant 128 : index
    %51 = vector.load %arg11[%c0_32, %c128] : memref<8x256xf32, #tpu.memory_space<vmem>>, vector<8x128xf32>
    tpu.vector_store %arg11[%c0_32, %c128], %19 {strides = array<i32>} : memref<8x256xf32, #tpu.memory_space<vmem>>, vector<8x128xf32>,
    return
  }
  func.func @transform_0(%arg0: i32) -> (i32, i32) {
    %c0_i32 = arith.constant 0 : i32
    %c0_i32_0 = arith.constant 0 : i32
    return %arg0, %c0_i32 : i32, i32
  }
  func.func @transform_1(%arg0: i32) -> (i32, i32) {
    %c0_i32 = arith.constant 0 : i32
    %c0_i32_0 = arith.constant 0 : i32
    return %arg0, %c0_i32 : i32, i32
  }
  func.func @transform_2(%arg0: i32) -> (i32, i32) {
    %c0_i32 = arith.constant 0 : i32
    %c0_i32_0 = arith.constant 0 : i32
    %c0_i32_1 = arith.constant 0 : i32
    return %c0_i32, %c0_i32_0 : i32, i32
  }
  func.func @transform_3(%arg0: i32) -> (i32, i32) {
    %c0_i32 = arith.constant 0 : i32
    %c0_i32_0 = arith.constant 0 : i32
    %c0_i32_1 = arith.constant 0 : i32
    return %c0_i32, %c0_i32_0 : i32, i32
  }
  func.func @transform_4(%arg0: i32) -> (i32, i32) {
    %c0_i32 = arith.constant 0 : i32
    %c0_i32_0 = arith.constant 0 : i32
    %c0_i32_1 = arith.constant 0 : i32
    return %c0_i32, %c0_i32_0 : i32, i32
  }
  func.func @transform_5(%arg0: i32) -> (i32, i32) {
    %c0_i32 = arith.constant 0 : i32
    %c0_i32_0 = arith.constant 0 : i32
    %c0_i32_1 = arith.constant 0 : i32
    return %c0_i32, %c0_i32_0 : i32, i32
  }
  func.func @transform_6(%arg0: i32) -> (i32, i32) {
    %c0_i32 = arith.constant 0 : i32
    %c0_i32_0 = arith.constant 0 : i32
    %c0_i32_1 = arith.constant 0 : i32
    return %c0_i32, %c0_i32_0 : i32, i32
  }
  func.func @transform_7(%arg0: i32) -> (i32, i32) {
    %c0_i32 = arith.constant 0 : i32
    %c0_i32_0 = arith.constant 0 : i32
    %c0_i32_1 = arith.constant 0 : i32
    return %c0_i32, %c0_i32_0 : i32, i32
  }
  func.func @transform_8(%arg0: i32) -> (i32, i32) {
    %c0_i32 = arith.constant 0 : i32
    %c0_i32_0 = arith.constant 0 : i32
    %c0_i32_1 = arith.constant 0 : i32
    return %c0_i32, %c0_i32_0 : i32, i32
  }
  func.func @transform_9(%arg0: i32) -> (i32, i32) {
    %c0_i32 = arith.constant 0 : i32
    %c0_i32_0 = arith.constant 0 : i32
    %c0_i32_1 = arith.constant 0 : i32
    return %c0_i32, %c0_i32_0 : i32, i32
  }
  func.func @transform_10(%arg0: i32) -> (i32, i32) {
    %c0_i32 = arith.constant 0 : i32
    %c0_i32_0 = arith.constant 0 : i32
    return %arg0, %c0_i32 : i32, i32
  }
  func.func @transform_11(%arg0: i32) -> (i32, i32) {
    %c0_i32 = arith.constant 0 : i32
    %c0_i32_0 = arith.constant 0 : i32
    return %arg0, %c0_i32 : i32, i32
  }
}

</mosaic_0001>

<llo_original>
// kernel: tpu_custom_call.1
$region0: #{tpu_custom_call.1}
  #allocation0 [shape = 'u32[]', space=smem, size = 0x4, offset = 0x4, fixed_abs, tag = 'smem constant byte address 0x4 - core index']
  #allocation1 [shape = 'u32[144,128]{1,0:T(1,128)}', space=vmem, size = 0x12000, scoped, tag = 'internal scratch']
  %s0 = inlined_call_operand.hbm [shape: f32[8,1024], index: 0, kind: input, shape index: {}]
  %s1 = inlined_call_operand.hbm [shape: f32[8,200], index: 1, kind: input, shape index: {}]
  %s2 = inlined_call_operand.hbm [shape: f32[1024,128], index: 2, kind: input, shape index: {}]
  %s3 = inlined_call_operand.vmem [shape: f32[1,128], index: 3, kind: input, shape index: {}]
  %s4 = inlined_call_operand.hbm [shape: f32[200,128], index: 4, kind: input, shape index: {}]
  %s5 = inlined_call_operand.vmem [shape: f32[1,128], index: 5, kind: input, shape index: {}]
  %s6 = inlined_call_operand.hbm [shape: f32[256,128], index: 6, kind: input, shape index: {}]
  %s7 = inlined_call_operand.vmem [shape: f32[1,128], index: 7, kind: input, shape index: {}]
  %s8 = inlined_call_operand.hbm [shape: f32[128,128], index: 8, kind: input, shape index: {}]
  %s9 = inlined_call_operand.vmem [shape: f32[1,128], index: 9, kind: input, shape index: {}]
  %s10 = inlined_call_operand.hbm [shape: f32[8,256], index: 10, kind: output, shape index: {0}]
  %s11 = inlined_call_operand.hbm [shape: f32[8,128], index: 11, kind: output, shape index: {1}]
  %12 = xla_tuple %s10, %s11
  %s13 = sld [smem:[#allocation0]]
  $region82: #{tpu_custom_call.1} parent=0
    _
  %s15 = ssub.s32 1, %s13
  %s16 = scalar_select 0, %s15, %s13
  $region1: #{tpu_custom_call.1} parent=0
    #allocation2 [shape = 'u8[32768]{0}', space=vmem, size = 0x8000, scoped, tag = 'input window, operand 0, single buffered']
    #allocation3 [shape = 's32[1]{0}', space=sflag, size = 0x4, scoped, tag = 'scoped memory for tpu_custom_call.1']
    #allocation4 [shape = 's32[1]{0}', space=sflag, size = 0x4, scoped, tag = 'scoped memory for tpu_custom_call.1']
    #allocation5 [shape = 'u8[8192]{0}', space=vmem, size = 0x2000, scoped, tag = 'input window, operand 1, single buffered']
    #allocation6 [shape = 's32[1]{0}', space=sflag, size = 0x4, scoped, tag = 'scoped memory for tpu_custom_call.1']
    #allocation7 [shape = 'u8[524288]{0}', space=vmem, size = 0x80000, scoped, tag = 'input window, operand 2, single buffered']
    #allocation8 [shape = 'u8[102400]{0}', space=vmem, size = 0x19000, scoped, tag = 'input window, operand 4, single buffered']
    #allocation9 [shape = 's32[1]{0}', space=sflag, size = 0x4, scoped, tag = 'scoped memory for tpu_custom_call.1']
    #allocation10 [shape = 'u8[131072]{0}', space=vmem, size = 0x20000, scoped, tag = 'input window, operand 6, single buffered']
    #allocation11 [shape = 'u8[65536]{0}', space=vmem, size = 0x10000, scoped, tag = 'input window, operand 8, single buffered']
    #allocation12 [shape = 's32[1]{0}', space=sflag, size = 0x4, scoped, tag = 'scoped memory for tpu_custom_call.1']
    #allocation13 [shape = 'u8[8192]{0}', space=vmem, size = 0x2000, scoped, tag = 'output window, operand 0, single buffered']
    #allocation14 [shape = 'u8[4096]{0}', space=vmem, size = 0x1000, scoped, tag = 'output window, operand 1, single buffered']
    #allocation15 [shape = 's32[1]{0}', space=sflag, size = 0x4, scoped, tag = 'scoped memory for tpu_custom_call.1']
    %17 = vsyncpa [#allocation3], 0
    %18 = vsyncpa [#allocation6], 0
    %19 = vsyncpa [#allocation9], 0
    %20 = vsyncpa [#allocation12], 0
    %21 = vsyncpa [#allocation4], 0
    %22 = vsyncpa [#allocation15], 0
    // Predicated region
    $region2: #{tpu_custom_call.1} parent=1 // pred_check
      _
    $region3: #{tpu_custom_call.1} parent=1 // pred_check_branch
      %24 = sbr.rel (0) target = $region5
    $region4: #{tpu_custom_call.1} parent=1 // pred_region
      %s26 = ssub.s32 1024, 1024
      %27 = vsyncadd [#allocation3], %s26
      %s29 = sshll.u32 [#allocation2], 4
      %s30 = int_to_ptr.vmem [resolvable:$true] %s29
      %32 = dma.hbm_to_vmem [thread:$0]  %s0, 1024, %s30, [#allocation3]
    $region5: #{tpu_custom_call.1} parent=1 // pred_fallthru
      _
    // Predicated region
    $region6: #{tpu_custom_call.1} parent=1 // pred_check
      _
    $region7: #{tpu_custom_call.1} parent=1 // pred_check_branch
      %34 = sbr.rel (0) target = $region9
    $region8: #{tpu_custom_call.1} parent=1 // pred_region
      %s36 = ssub.s32 256, 256
      %37 = vsyncadd [#allocation6], %s36
      %s39 = sshll.u32 [#allocation5], 4
      %s40 = int_to_ptr.vmem [resolvable:$true] %s39
      %42 = dma.hbm_to_vmem [thread:$0]  %s1, 256, %s40, [#allocation6]
    $region9: #{tpu_custom_call.1} parent=1 // pred_fallthru
      _
    // Predicated region
    $region10: #{tpu_custom_call.1} parent=1 // pred_check
      _
    $region11: #{tpu_custom_call.1} parent=1 // pred_check_branch
      %44 = sbr.rel (0) target = $region13
    $region12: #{tpu_custom_call.1} parent=1 // pred_region
      %s46 = ssub.s32 16384, 16384
      %47 = vsyncadd [#allocation6], %s46
      %s48 = sshll.u32 [#allocation7], 4
      %s49 = int_to_ptr.vmem [resolvable:$true] %s48
      %54 = dma.hbm_to_vmem [thread:$0]  %s2, 16384, %s49, [#allocation6], 128, 128, 8
    $region13: #{tpu_custom_call.1} parent=1 // pred_fallthru
      _
    // Predicated region
    $region14: #{tpu_custom_call.1} parent=1 // pred_check
      _
    $region15: #{tpu_custom_call.1} parent=1 // pred_check_branch
      %56 = sbr.rel (0) target = $region17
    $region16: #{tpu_custom_call.1} parent=1 // pred_region
      _
    $region17: #{tpu_custom_call.1} parent=1 // pred_fallthru
      _
    // Predicated region
    $region18: #{tpu_custom_call.1} parent=1 // pred_check
      _
    $region19: #{tpu_custom_call.1} parent=1 // pred_check_branch
      %58 = sbr.rel (0) target = $region21
    $region20: #{tpu_custom_call.1} parent=1 // pred_region
      %s60 = ssub.s32 3200, 3200
      %61 = vsyncadd [#allocation9], %s60
      %s62 = sshll.u32 [#allocation8], 4
      %s63 = int_to_ptr.vmem [resolvable:$true] %s62
      %68 = dma.hbm_to_vmem [thread:$0]  %s4, 3200, %s63, [#allocation9], 128, 128, 8
    $region21: #{tpu_custom_call.1} parent=1 // pred_fallthru
      _
    // Predicated region
    $region22: #{tpu_custom_call.1} parent=1 // pred_check
      _
    $region23: #{tpu_custom_call.1} parent=1 // pred_check_branch
      %70 = sbr.rel (0) target = $region25
    $region24: #{tpu_custom_call.1} parent=1 // pred_region
      _
    $region25: #{tpu_custom_call.1} parent=1 // pred_fallthru
      _
    // Predicated region
    $region26: #{tpu_custom_call.1} parent=1 // pred_check
      _
    $region27: #{tpu_custom_call.1} parent=1 // pred_check_branch
      %72 = sbr.rel (0) target = $region29
    $region28: #{tpu_custom_call.1} parent=1 // pred_region
      %s74 = ssub.s32 4096, 4096
      %75 = vsyncadd [#allocation9], %s74
      %s76 = sshll.u32 [#allocation10], 4
      %s77 = int_to_ptr.vmem [resolvable:$true] %s76
      %82 = dma.hbm_to_vmem [thread:$0]  %s6, 4096, %s77, [#allocation9], 128, 128, 8
    $region29: #{tpu_custom_call.1} parent=1 // pred_fallthru
      _
    // Predicated region
    $region30: #{tpu_custom_call.1} parent=1 // pred_check
      _
    $region31: #{tpu_custom_call.1} parent=1 // pred_check_branch
      %84 = sbr.rel (0) target = $region33
    $region32: #{tpu_custom_call.1} parent=1 // pred_region
      _
    $region33: #{tpu_custom_call.1} parent=1 // pred_fallthru
      _
    // Predicated region
    $region34: #{tpu_custom_call.1} parent=1 // pred_check
      _
    $region35: #{tpu_custom_call.1} parent=1 // pred_check_branch
      %86 = sbr.rel (0) target = $region37
    $region36: #{tpu_custom_call.1} parent=1 // pred_region
      %s88 = ssub.s32 2048, 2048
      %89 = vsyncadd [#allocation12], %s88
      %s90 = sshll.u32 [#allocation11], 4
      %s91 = int_to_ptr.vmem [resolvable:$true] %s90
      %96 = dma.hbm_to_vmem [thread:$0]  %s8, 2048, %s91, [#allocation12], 128, 128, 8
    $region37: #{tpu_custom_call.1} parent=1 // pred_fallthru
      _
    // Predicated region
    $region38: #{tpu_custom_call.1} parent=1 // pred_check
      _
    $region39: #{tpu_custom_call.1} parent=1 // pred_check_branch
      %98 = sbr.rel (0) target = $region41
    $region40: #{tpu_custom_call.1} parent=1 // pred_region
      _
    $region41: #{tpu_custom_call.1} parent=1 // pred_fallthru
      _
    // Predicated region
    $region42: #{tpu_custom_call.1} parent=1 // pred_check
      _
    $region43: #{tpu_custom_call.1} parent=1 // pred_check_branch
      %100 = sbr.rel (0) target = $region45
    $region44: #{tpu_custom_call.1} parent=1 // pred_region
      %101 = dma.done [#allocation3], 1024
    $region45: #{tpu_custom_call.1} parent=1 // pred_fallthru
      _
    // Predicated region
    $region46: #{tpu_custom_call.1} parent=1 // pred_check
      _
    $region47: #{tpu_custom_call.1} parent=1 // pred_check_branch
      %103 = sbr.rel (0) target = $region49
    $region48: #{tpu_custom_call.1} parent=1 // pred_region
      %104 = dma.done [#allocation6], 256
    $region49: #{tpu_custom_call.1} parent=1 // pred_fallthru
      _
    // Predicated region
    $region50: #{tpu_custom_call.1} parent=1 // pred_check
      _
    $region51: #{tpu_custom_call.1} parent=1 // pred_check_branch
      %106 = sbr.rel (0) target = $region53
    $region52: #{tpu_custom_call.1} parent=1 // pred_region
      %107 = dma.done [#allocation6], 16384
    $region53: #{tpu_custom_call.1} parent=1 // pred_fallthru
      _
    // Predicated region
    $region54: #{tpu_custom_call.1} parent=1 // pred_check
      _
    $region55: #{tpu_custom_call.1} parent=1 // pred_check_branch
      %109 = sbr.rel (0) target = $region57
    $region56: #{tpu_custom_call.1} parent=1 // pred_region
      %110 = dma.done [#allocation9], 3200
    $region57: #{tpu_custom_call.1} parent=1 // pred_fallthru
      _
    // Predicated region
    $region58: #{tpu_custom_call.1} parent=1 // pred_check
      _
    $region59: #{tpu_custom_call.1} parent=1 // pred_check_branch
      %112 = sbr.rel (0) target = $region61
    $region60: #{tpu_custom_call.1} parent=1 // pred_region
      %113 = dma.done [#allocation9], 4096
    $region61: #{tpu_custom_call.1} parent=1 // pred_fallthru
      _
    // Predicated region
    $region62: #{tpu_custom_call.1} parent=1 // pred_check
      _
    $region63: #{tpu_custom_call.1} parent=1 // pred_check_branch
      %115 = sbr.rel (0) target = $region65
    $region64: #{tpu_custom_call.1} parent=1 // pred_region
      %116 = dma.done [#allocation12], 2048
    $region65: #{tpu_custom_call.1} parent=1 // pred_fallthru
      _
    %v118 = vld [vmem:[#allocation2] sm:$0xff]
    %v119 = vld [vmem:[#allocation2 + $0x8] sm:$0xff]
    %v120 = vld [vmem:[#allocation2 + $0x10] sm:$0xff]
    %v121 = vld [vmem:[#allocation2 + $0x18] sm:$0xff]
    %v122 = vld [vmem:[#allocation2 + $0x20] sm:$0xff]
    %v123 = vld [vmem:[#allocation2 + $0x28] sm:$0xff]
    %v124 = vld [vmem:[#allocation2 + $0x30] sm:$0xff]
    %v125 = vld [vmem:[#allocation2 + $0x38] sm:$0xff]
    %v126 = vpack.c.bf16 %v118, %v118
    %v127 = vpack.c.bf16 %v119, %v119
    %v128 = vpack.c.bf16 %v120, %v120
    %v129 = vpack.c.bf16 %v121, %v121
    %v130 = vpack.c.bf16 %v122, %v122
    %v131 = vpack.c.bf16 %v123, %v123
    %v132 = vpack.c.bf16 %v124, %v124
    %v133 = vpack.c.bf16 %v125, %v125
    %v134 = vld [vmem:[#allocation7] sm:$0xff]
    %v135 = vld [vmem:[#allocation7 + $0x8] sm:$0xff]
    %v136 = vld [vmem:[#allocation7 + $0x10] sm:$0xff]
    %v137 = vld [vmem:[#allocation7 + $0x18] sm:$0xff]
    %v138 = vld [vmem:[#allocation7 + $0x20] sm:$0xff]
    %v139 = vld [vmem:[#allocation7 + $0x28] sm:$0xff]
    %v140 = vld [vmem:[#allocation7 + $0x30] sm:$0xff]
    %v141 = vld [vmem:[#allocation7 + $0x38] sm:$0xff]
    %v142 = vld [vmem:[#allocation7 + $0x40] sm:$0xff]
    %v143 = vld [vmem:[#allocation7 + $0x48] sm:$0xff]
    %v144 = vld [vmem:[#allocation7 + $0x50] sm:$0xff]
    %v145 = vld [vmem:[#allocation7 + $0x58] sm:$0xff]
    %v146 = vld [vmem:[#allocation7 + $0x60] sm:$0xff]
    %v147 = vld [vmem:[#allocation7 + $0x68] sm:$0xff]
    %v148 = vld [vmem:[#allocation7 + $0x70] sm:$0xff]
    %v149 = vld [vmem:[#allocation7 + $0x78] sm:$0xff]
    %v150 = vld [vmem:[#allocation7 + $0x80] sm:$0xff]
    %v151 = vld [vmem:[#allocation7 + $0x88] sm:$0xff]
    %v152 = vld [vmem:[#allocation7 + $0x90] sm:$0xff]
    %v153 = vld [vmem:[#allocation7 + $0x98] sm:$0xff]
    %v154 = vld [vmem:[#allocation7 + $0xa0] sm:$0xff]
    %v155 = vld [vmem:[#allocation7 + $0xa8] sm:$0xff]
    %v156 = vld [vmem:[#allocation7 + $0xb0] sm:$0xff]
    %v157 = vld [vmem:[#allocation7 + $0xb8] sm:$0xff]
    %v158 = vld [vmem:[#allocation7 + $0xc0] sm:$0xff]
    %v159 = vld [vmem:[#allocation7 + $0xc8] sm:$0xff]
    %v160 = vld [vmem:[#allocation7 + $0xd0] sm:$0xff]
    %v161 = vld [vmem:[#allocation7 + $0xd8] sm:$0xff]
    %v162 = vld [vmem:[#allocation7 + $0xe0] sm:$0xff]
    %v163 = vld [vmem:[#allocation7 + $0xe8] sm:$0xff]
    %v164 = vld [vmem:[#allocation7 + $0xf0] sm:$0xff]
    %v165 = vld [vmem:[#allocation7 + $0xf8] sm:$0xff]
    %v166 = vld [vmem:[#allocation7 + $0x100] sm:$0xff]
    %v167 = vld [vmem:[#allocation7 + $0x108] sm:$0xff]
    %v168 = vld [vmem:[#allocation7 + $0x110] sm:$0xff]
    %v169 = vld [vmem:[#allocation7 + $0x118] sm:$0xff]
    %v170 = vld [vmem:[#allocation7 + $0x120] sm:$0xff]
    %v171 = vld [vmem:[#allocation7 + $0x128] sm:$0xff]
    %v172 = vld [vmem:[#allocation7 + $0x130] sm:$0xff]
    %v173 = vld [vmem:[#allocation7 + $0x138] sm:$0xff]
    %v174 = vld [vmem:[#allocation7 + $0x140] sm:$0xff]
    %v175 = vld [vmem:[#allocation7 + $0x148] sm:$0xff]
    %v176 = vld [vmem:[#allocation7 + $0x150] sm:$0xff]
    %v177 = vld [vmem:[#allocation7 + $0x158] sm:$0xff]
    %v178 = vld [vmem:[#allocation7 + $0x160] sm:$0xff]
    %v179 = vld [vmem:[#allocation7 + $0x168] sm:$0xff]
    %v180 = vld [vmem:[#allocation7 + $0x170] sm:$0xff]
    %v181 = vld [vmem:[#allocation7 + $0x178] sm:$0xff]
    %v182 = vld [vmem:[#allocation7 + $0x180] sm:$0xff]
    %v183 = vld [vmem:[#allocation7 + $0x188] sm:$0xff]
    %v184 = vld [vmem:[#allocation7 + $0x190] sm:$0xff]
    %v185 = vld [vmem:[#allocation7 + $0x198] sm:$0xff]
    %v186 = vld [vmem:[#allocation7 + $0x1a0] sm:$0xff]
    %v187 = vld [vmem:[#allocation7 + $0x1a8] sm:$0xff]
    %v188 = vld [vmem:[#allocation7 + $0x1b0] sm:$0xff]
    %v189 = vld [vmem:[#allocation7 + $0x1b8] sm:$0xff]
    %v190 = vld [vmem:[#allocation7 + $0x1c0] sm:$0xff]
    %v191 = vld [vmem:[#allocation7 + $0x1c8] sm:$0xff]
    %v192 = vld [vmem:[#allocation7 + $0x1d0] sm:$0xff]
    %v193 = vld [vmem:[#allocation7 + $0x1d8] sm:$0xff]
    %v194 = vld [vmem:[#allocation7 + $0x1e0] sm:$0xff]
    %v195 = vld [vmem:[#allocation7 + $0x1e8] sm:$0xff]
    %v196 = vld [vmem:[#allocation7 + $0x1f0] sm:$0xff]
    %v197 = vld [vmem:[#allocation7 + $0x1f8] sm:$0xff]
    %v198 = vld [vmem:[#allocation7 + $0x200] sm:$0xff]
    %v199 = vld [vmem:[#allocation7 + $0x208] sm:$0xff]
    %v200 = vld [vmem:[#allocation7 + $0x210] sm:$0xff]
    %v201 = vld [vmem:[#allocation7 + $0x218] sm:$0xff]
    %v202 = vld [vmem:[#allocation7 + $0x220] sm:$0xff]
    %v203 = vld [vmem:[#allocation7 + $0x228] sm:$0xff]
    %v204 = vld [vmem:[#allocation7 + $0x230] sm:$0xff]
    %v205 = vld [vmem:[#allocation7 + $0x238] sm:$0xff]
    %v206 = vld [vmem:[#allocation7 + $0x240] sm:$0xff]
    %v207 = vld [vmem:[#allocation7 + $0x248] sm:$0xff]
    %v208 = vld [vmem:[#allocation7 + $0x250] sm:$0xff]
    %v209 = vld [vmem:[#allocation7 + $0x258] sm:$0xff]
    %v210 = vld [vmem:[#allocation7 + $0x260] sm:$0xff]
    %v211 = vld [vmem:[#allocation7 + $0x268] sm:$0xff]
    %v212 = vld [vmem:[#allocation7 + $0x270] sm:$0xff]
    %v213 = vld [vmem:[#allocation7 + $0x278] sm:$0xff]
    %v214 = vld [vmem:[#allocation7 + $0x280] sm:$0xff]
    %v215 = vld [vmem:[#allocation7 + $0x288] sm:$0xff]
    %v216 = vld [vmem:[#allocation7 + $0x290] sm:$0xff]
    %v217 = vld [vmem:[#allocation7 + $0x298] sm:$0xff]
    %v218 = vld [vmem:[#allocation7 + $0x2a0] sm:$0xff]
    %v219 = vld [vmem:[#allocation7 + $0x2a8] sm:$0xff]
    %v220 = vld [vmem:[#allocation7 + $0x2b0] sm:$0xff]
    %v221 = vld [vmem:[#allocation7 + $0x2b8] sm:$0xff]
    %v222 = vld [vmem:[#allocation7 + $0x2c0] sm:$0xff]
    %v223 = vld [vmem:[#allocation7 + $0x2c8] sm:$0xff]
    %v224 = vld [vmem:[#allocation7 + $0x2d0] sm:$0xff]
    %v225 = vld [vmem:[#allocation7 + $0x2d8] sm:$0xff]
    %v226 = vld [vmem:[#allocation7 + $0x2e0] sm:$0xff]
    %v227 = vld [vmem:[#allocation7 + $0x2e8] sm:$0xff]
    %v228 = vld [vmem:[#allocation7 + $0x2f0] sm:$0xff]
    %v229 = vld [vmem:[#allocation7 + $0x2f8] sm:$0xff]
    %v230 = vld [vmem:[#allocation7 + $0x300] sm:$0xff]
    %v231 = vld [vmem:[#allocation7 + $0x308] sm:$0xff]
    %v232 = vld [vmem:[#allocation7 + $0x310] sm:$0xff]
    %v233 = vld [vmem:[#allocation7 + $0x318] sm:$0xff]
    %v234 = vld [vmem:[#allocation7 + $0x320] sm:$0xff]
    %v235 = vld [vmem:[#allocation7 + $0x328] sm:$0xff]
    %v236 = vld [vmem:[#allocation7 + $0x330] sm:$0xff]
    %v237 = vld [vmem:[#allocation7 + $0x338] sm:$0xff]
    %v238 = vld [vmem:[#allocation7 + $0x340] sm:$0xff]
    %v239 = vld [vmem:[#allocation7 + $0x348] sm:$0xff]
    %v240 = vld [vmem:[#allocation7 + $0x350] sm:$0xff]
    %v241 = vld [vmem:[#allocation7 + $0x358] sm:$0xff]
    %v242 = vld [vmem:[#allocation7 + $0x360] sm:$0xff]
    %v243 = vld [vmem:[#allocation7 + $0x368] sm:$0xff]
    %v244 = vld [vmem:[#allocation7 + $0x370] sm:$0xff]
    %v245 = vld [vmem:[#allocation7 + $0x378] sm:$0xff]
    %v246 = vld [vmem:[#allocation7 + $0x380] sm:$0xff]
    %v247 = vld [vmem:[#allocation7 + $0x388] sm:$0xff]
    %v248 = vld [vmem:[#allocation7 + $0x390] sm:$0xff]
    %v249 = vld [vmem:[#allocation7 + $0x398] sm:$0xff]
    %v250 = vld [vmem:[#allocation7 + $0x3a0] sm:$0xff]
    %v251 = vld [vmem:[#allocation7 + $0x3a8] sm:$0xff]
    %v252 = vld [vmem:[#allocation7 + $0x3b0] sm:$0xff]
    %v253 = vld [vmem:[#allocation7 + $0x3b8] sm:$0xff]
    %v254 = vld [vmem:[#allocation7 + $0x3c0] sm:$0xff]
    %v255 = vld [vmem:[#allocation7 + $0x3c8] sm:$0xff]
    %v256 = vld [vmem:[#allocation7 + $0x3d0] sm:$0xff]
    %v257 = vld [vmem:[#allocation7 + $0x3d8] sm:$0xff]
    %v258 = vld [vmem:[#allocation7 + $0x3e0] sm:$0xff]
    %v259 = vld [vmem:[#allocation7 + $0x3e8] sm:$0xff]
    %v260 = vld [vmem:[#allocation7 + $0x3f0] sm:$0xff]
    %v261 = vld [vmem:[#allocation7 + $0x3f8] sm:$0xff]
    %v262 = vpack.c.bf16 %v135, %v134
    %v263 = vpack.c.bf16 %v137, %v136
    %v264 = vpack.c.bf16 %v139, %v138
    %v265 = vpack.c.bf16 %v141, %v140
    %v266 = vpack.c.bf16 %v143, %v142
    %v267 = vpack.c.bf16 %v145, %v144
    %v268 = vpack.c.bf16 %v147, %v146
    %v269 = vpack.c.bf16 %v149, %v148
    %v270 = vpack.c.bf16 %v151, %v150
    %v271 = vpack.c.bf16 %v153, %v152
    %v272 = vpack.c.bf16 %v155, %v154
    %v273 = vpack.c.bf16 %v157, %v156
    %v274 = vpack.c.bf16 %v159, %v158
    %v275 = vpack.c.bf16 %v161, %v160
    %v276 = vpack.c.bf16 %v163, %v162
    %v277 = vpack.c.bf16 %v165, %v164
    %v278 = vpack.c.bf16 %v167, %v166
    %v279 = vpack.c.bf16 %v169, %v168
    %v280 = vpack.c.bf16 %v171, %v170
    %v281 = vpack.c.bf16 %v173, %v172
    %v282 = vpack.c.bf16 %v175, %v174
    %v283 = vpack.c.bf16 %v177, %v176
    %v284 = vpack.c.bf16 %v179, %v178
    %v285 = vpack.c.bf16 %v181, %v180
    %v286 = vpack.c.bf16 %v183, %v182
    %v287 = vpack.c.bf16 %v185, %v184
    %v288 = vpack.c.bf16 %v187, %v186
    %v289 = vpack.c.bf16 %v189, %v188
    %v290 = vpack.c.bf16 %v191, %v190
    %v291 = vpack.c.bf16 %v193, %v192
    %v292 = vpack.c.bf16 %v195, %v194
    %v293 = vpack.c.bf16 %v197, %v196
    %v294 = vpack.c.bf16 %v199, %v198
    %v295 = vpack.c.bf16 %v201, %v200
    %v296 = vpack.c.bf16 %v203, %v202
    %v297 = vpack.c.bf16 %v205, %v204
    %v298 = vpack.c.bf16 %v207, %v206
    %v299 = vpack.c.bf16 %v209, %v208
    %v300 = vpack.c.bf16 %v211, %v210
    %v301 = vpack.c.bf16 %v213, %v212
    %v302 = vpack.c.bf16 %v215, %v214
    %v303 = vpack.c.bf16 %v217, %v216
    %v304 = vpack.c.bf16 %v219, %v218
    %v305 = vpack.c.bf16 %v221, %v220
    %v306 = vpack.c.bf16 %v223, %v222
    %v307 = vpack.c.bf16 %v225, %v224
    %v308 = vpack.c.bf16 %v227, %v226
    %v309 = vpack.c.bf16 %v229, %v228
    %v310 = vpack.c.bf16 %v231, %v230
    %v311 = vpack.c.bf16 %v233, %v232
    %v312 = vpack.c.bf16 %v235, %v234
    %v313 = vpack.c.bf16 %v237, %v236
    %v314 = vpack.c.bf16 %v239, %v238
    %v315 = vpack.c.bf16 %v241, %v240
    %v316 = vpack.c.bf16 %v243, %v242
    %v317 = vpack.c.bf16 %v245, %v244
    %v318 = vpack.c.bf16 %v247, %v246
    %v319 = vpack.c.bf16 %v249, %v248
    %v320 = vpack.c.bf16 %v251, %v250
    %v321 = vpack.c.bf16 %v253, %v252
    %v322 = vpack.c.bf16 %v255, %v254
    %v323 = vpack.c.bf16 %v257, %v256
    %v324 = vpack.c.bf16 %v259, %v258
    %v325 = vpack.c.bf16 %v261, %v260
    %v326 = vld [vmem:[%s3] sm:$0x1]
    %v328 = vlaneseq
    %v329 = vshrl.u32 %v328, 7
    %v330 = vsub.s32 0, %v329
    %v331 = vrot.slane %v326, %v330
    %333 = vmatprep.subr.bf16.mxu0 0
    %334 = vmatpush1.bf16.msra.mxu0 %v262
    %335 = vmatprep.subr.bf16.mxu0 0
    %336 = vmatpush1.bf16.msra.mxu0 %v263
    %337 = vmatprep.subr.bf16.mxu0 0
    %338 = vmatpush1.bf16.msra.mxu0 %v264
    %339 = vmatprep.subr.bf16.mxu0 0
    %340 = vmatpush1.bf16.msra.mxu0 %v265
    %341 = vmatprep.subr.bf16.mxu0 0
    %342 = vmatpush1.bf16.msra.mxu0 %v266
    %343 = vmatprep.subr.bf16.mxu0 0
    %344 = vmatpush1.bf16.msra.mxu0 %v267
    %345 = vmatprep.subr.bf16.mxu0 0
    %346 = vmatpush1.bf16.msra.mxu0 %v268
    %347 = vmatprep.subr.bf16.mxu0 0
    %348 = vmatpush1.bf16.msra.mxu0 %v269
    %349 = vmatprep.subr.bf16.mxu0 0
    %350 = vmatpush1.bf16.msra.mxu0 %v270
    %351 = vmatprep.subr.bf16.mxu0 0
    %352 = vmatpush1.bf16.msra.mxu0 %v271
    %353 = vmatprep.subr.bf16.mxu0 0
    %354 = vmatpush1.bf16.msra.mxu0 %v272
    %355 = vmatprep.subr.bf16.mxu0 0
    %356 = vmatpush1.bf16.msra.mxu0 %v273
    %357 = vmatprep.subr.bf16.mxu0 0
    %358 = vmatpush1.bf16.msra.mxu0 %v274
    %359 = vmatprep.subr.bf16.mxu0 0
    %360 = vmatpush1.bf16.msra.mxu0 %v275
    %361 = vmatprep.subr.bf16.mxu0 0
    %362 = vmatpush1.bf16.msra.mxu0 %v276
    %363 = vmatprep.subr.bf16.mxu0 0
    %364 = vmatpush1.bf16.msra.mxu0 %v277
    %365 = vmatprep.mubr.bf16.mxu0 %v127
    %366 = vmatmul.mubr.bf16.gmra.mrb[0].mxu0 %v126
    %v367 = vpop.f32.mrb[0].mxu0
    %v368 = vadd.f32 %v331, %v367
    %v369 = vpop.f32.mrb[0].mxu0
    %v370 = vpop.f32.mrb[0].mxu0
    %v371 = vpop.f32.mrb[0].mxu0
    %372 = vdwg.mxu0
    %373 = vmatprep.subr.bf16.mxu0 0
    %374 = vmatpush1.bf16.msra.mxu0 %v278
    %375 = vmatprep.subr.bf16.mxu0 0
    %376 = vmatpush1.bf16.msra.mxu0 %v279
    %377 = vmatprep.subr.bf16.mxu0 0
    %378 = vmatpush1.bf16.msra.mxu0 %v280
    %379 = vmatprep.subr.bf16.mxu0 0
    %380 = vmatpush1.bf16.msra.mxu0 %v281
    %381 = vmatprep.subr.bf16.mxu0 0
    %382 = vmatpush1.bf16.msra.mxu0 %v282
    %383 = vmatprep.subr.bf16.mxu0 0
    %384 = vmatpush1.bf16.msra.mxu0 %v283
    %385 = vmatprep.subr.bf16.mxu0 0
    %386 = vmatpush1.bf16.msra.mxu0 %v284
    %387 = vmatprep.subr.bf16.mxu0 0
    %388 = vmatpush1.bf16.msra.mxu0 %v285
    %389 = vmatprep.subr.bf16.mxu0 0
    %390 = vmatpush1.bf16.msra.mxu0 %v286
    %391 = vmatprep.subr.bf16.mxu0 0
    %392 = vmatpush1.bf16.msra.mxu0 %v287
    %393 = vmatprep.subr.bf16.mxu0 0
    %394 = vmatpush1.bf16.msra.mxu0 %v288
    %395 = vmatprep.subr.bf16.mxu0 0
    %396 = vmatpush1.bf16.msra.mxu0 %v289
    %397 = vmatprep.subr.bf16.mxu0 0
    %398 = vmatpush1.bf16.msra.mxu0 %v290
    %399 = vmatprep.subr.bf16.mxu0 0
    %400 = vmatpush1.bf16.msra.mxu0 %v291
    %401 = vmatprep.subr.bf16.mxu0 0
    %402 = vmatpush1.bf16.msra.mxu0 %v292
    %403 = vmatprep.subr.bf16.mxu0 0
    %404 = vmatpush1.bf16.msra.mxu0 %v293
    %405 = vmatprep.mubr.bf16.mxu0 %v129
    %406 = vmatmul.mubr.bf16.gmra.mrb[0].mxu0 %v128
    %v407 = vpop.f32.mrb[0].mxu0
    %v408 = vadd.f32 %v368, %v407
    %v409 = vpop.f32.mrb[0].mxu0
    %v410 = vpop.f32.mrb[0].mxu0
    %v411 = vpop.f32.mrb[0].mxu0
    %412 = vdwg.mxu0
    %413 = vmatprep.subr.bf16.mxu0 0
    %414 = vmatpush1.bf16.msra.mxu0 %v294
    %415 = vmatprep.subr.bf16.mxu0 0
    %416 = vmatpush1.bf16.msra.mxu0 %v295
    %417 = vmatprep.subr.bf16.mxu0 0
    %418 = vmatpush1.bf16.msra.mxu0 %v296
    %419 = vmatprep.subr.bf16.mxu0 0
    %420 = vmatpush1.bf16.msra.mxu0 %v297
    %421 = vmatprep.subr.bf16.mxu0 0
    %422 = vmatpush1.bf16.msra.mxu0 %v298
    %423 = vmatprep.subr.bf16.mxu0 0
    %424 = vmatpush1.bf16.msra.mxu0 %v299
    %425 = vmatprep.subr.bf16.mxu0 0
    %426 = vmatpush1.bf16.msra.mxu0 %v300
    %427 = vmatprep.subr.bf16.mxu0 0
    %428 = vmatpush1.bf16.msra.mxu0 %v301
    %429 = vmatprep.subr.bf16.mxu0 0
    %430 = vmatpush1.bf16.msra.mxu0 %v302
    %431 = vmatprep.subr.bf16.mxu0 0
    %432 = vmatpush1.bf16.msra.mxu0 %v303
    %433 = vmatprep.subr.bf16.mxu0 0
    %434 = vmatpush1.bf16.msra.mxu0 %v304
    %435 = vmatprep.subr.bf16.mxu0 0
    %436 = vmatpush1.bf16.msra.mxu0 %v305
    %437 = vmatprep.subr.bf16.mxu0 0
    %438 = vmatpush1.bf16.msra.mxu0 %v306
    %439 = vmatprep.subr.bf16.mxu0 0
    %440 = vmatpush1.bf16.msra.mxu0 %v307
    %441 = vmatprep.subr.bf16.mxu0 0
    %442 = vmatpush1.bf16.msra.mxu0 %v308
    %443 = vmatprep.subr.bf16.mxu0 0
    %444 = vmatpush1.bf16.msra.mxu0 %v309
    %445 = vmatprep.mubr.bf16.mxu0 %v131
    %446 = vmatmul.mubr.bf16.gmra.mrb[0].mxu0 %v130
    %v447 = vpop.f32.mrb[0].mxu0
    %v448 = vadd.f32 %v408, %v447
    %v449 = vpop.f32.mrb[0].mxu0
    %v450 = vpop.f32.mrb[0].mxu0
    %v451 = vpop.f32.mrb[0].mxu0
    %452 = vdwg.mxu0
    %453 = vmatprep.subr.bf16.mxu0 0
    %454 = vmatpush1.bf16.msra.mxu0 %v310
    %455 = vmatprep.subr.bf16.mxu0 0
    %456 = vmatpush1.bf16.msra.mxu0 %v311
    %457 = vmatprep.subr.bf16.mxu0 0
    %458 = vmatpush1.bf16.msra.mxu0 %v312
    %459 = vmatprep.subr.bf16.mxu0 0
    %460 = vmatpush1.bf16.msra.mxu0 %v313
    %461 = vmatprep.subr.bf16.mxu0 0
    %462 = vmatpush1.bf16.msra.mxu0 %v314
    %463 = vmatprep.subr.bf16.mxu0 0
    %464 = vmatpush1.bf16.msra.mxu0 %v315
    %465 = vmatprep.subr.bf16.mxu0 0
    %466 = vmatpush1.bf16.msra.mxu0 %v316
    %467 = vmatprep.subr.bf16.mxu0 0
    %468 = vmatpush1.bf16.msra.mxu0 %v317
    %469 = vmatprep.subr.bf16.mxu0 0
    %470 = vmatpush1.bf16.msra.mxu0 %v318
    %471 = vmatprep.subr.bf16.mxu0 0
    %472 = vmatpush1.bf16.msra.mxu0 %v319
    %473 = vmatprep.subr.bf16.mxu0 0
    %474 = vmatpush1.bf16.msra.mxu0 %v320
    %475 = vmatprep.subr.bf16.mxu0 0
    %476 = vmatpush1.bf16.msra.mxu0 %v321
    %477 = vmatprep.subr.bf16.mxu0 0
    %478 = vmatpush1.bf16.msra.mxu0 %v322
    %479 = vmatprep.subr.bf16.mxu0 0
    %480 = vmatpush1.bf16.msra.mxu0 %v323
    %481 = vmatprep.subr.bf16.mxu0 0
    %482 = vmatpush1.bf16.msra.mxu0 %v324
    %483 = vmatprep.subr.bf16.mxu0 0
    %484 = vmatpush1.bf16.msra.mxu0 %v325
    %485 = vmatprep.mubr.bf16.mxu0 %v133
    %486 = vmatmul.mubr.bf16.gmra.mrb[0].mxu0 %v132
    %v487 = vpop.f32.mrb[0].mxu0
    %v488 = vadd.f32 %v448, %v487
    %v489 = vpop.f32.mrb[0].mxu0
    %v490 = vpop.f32.mrb[0].mxu0
    %v491 = vpop.f32.mrb[0].mxu0
    %492 = vdwg.mxu0
    %v493 = vmax.f32 %v488, 0.0
    %v494 = vld [vmem:[#allocation5] sm:$0xff]
    %v495 = vld [vmem:[#allocation5 + $0x8] sm:$0xff]
    %v496 = vpack.c.bf16 %v494, %v494
    %v497 = vpack.c.bf16 %v495, %v495
    %v498 = vld [vmem:[#allocation8] sm:$0xff]
    %v499 = vld [vmem:[#allocation8 + $0x8] sm:$0xff]
    %v500 = vld [vmem:[#allocation8 + $0x10] sm:$0xff]
    %v501 = vld [vmem:[#allocation8 + $0x18] sm:$0xff]
    %v502 = vld [vmem:[#allocation8 + $0x20] sm:$0xff]
    %v503 = vld [vmem:[#allocation8 + $0x28] sm:$0xff]
    %v504 = vld [vmem:[#allocation8 + $0x30] sm:$0xff]
    %v505 = vld [vmem:[#allocation8 + $0x38] sm:$0xff]
    %v506 = vld [vmem:[#allocation8 + $0x40] sm:$0xff]
    %v507 = vld [vmem:[#allocation8 + $0x48] sm:$0xff]
    %v508 = vld [vmem:[#allocation8 + $0x50] sm:$0xff]
    %v509 = vld [vmem:[#allocation8 + $0x58] sm:$0xff]
    %v510 = vld [vmem:[#allocation8 + $0x60] sm:$0xff]
    %v511 = vld [vmem:[#allocation8 + $0x68] sm:$0xff]
    %v512 = vld [vmem:[#allocation8 + $0x70] sm:$0xff]
    %v513 = vld [vmem:[#allocation8 + $0x78] sm:$0xff]
    %v514 = vld [vmem:[#allocation8 + $0x80] sm:$0xff]
    %v515 = vld [vmem:[#allocation8 + $0x88] sm:$0xff]
    %v516 = vld [vmem:[#allocation8 + $0x90] sm:$0xff]
    %v517 = vld [vmem:[#allocation8 + $0x98] sm:$0xff]
    %v518 = vld [vmem:[#allocation8 + $0xa0] sm:$0xff]
    %v519 = vld [vmem:[#allocation8 + $0xa8] sm:$0xff]
    %v520 = vld [vmem:[#allocation8 + $0xb0] sm:$0xff]
    %v521 = vld [vmem:[#allocation8 + $0xb8] sm:$0xff]
    %v522 = vld [vmem:[#allocation8 + $0xc0] sm:$0xff]
    %v523 = vpack.c.bf16 %v499, %v498
    %v524 = vpack.c.bf16 %v501, %v500
    %v525 = vpack.c.bf16 %v503, %v502
    %v526 = vpack.c.bf16 %v505, %v504
    %v527 = vpack.c.bf16 %v507, %v506
    %v528 = vpack.c.bf16 %v509, %v508
    %v529 = vpack.c.bf16 %v511, %v510
    %v530 = vpack.c.bf16 %v513, %v512
    %v531 = vpack.c.bf16 %v515, %v514
    %v532 = vpack.c.bf16 %v517, %v516
    %v533 = vpack.c.bf16 %v519, %v518
    %v534 = vpack.c.bf16 %v521, %v520
    %v535 = vpack.c.bf16 %v522, %v522
    %v536 = vld [vmem:[%s5] sm:$0x1]
    %v538 = vlaneseq
    %v539 = vshrl.u32 %v538, 7
    %v540 = vsub.s32 0, %v539
    %v541 = vrot.slane %v536, %v540
    %vm543 = vcmask 588800
    %v545 = vsel %vm543, %v497, 0
    %vm547 = vcmask 1043456
    %v549 = vsel %vm547, %v535, 0
    %551 = vmatprep.subr.bf16.mxu0 0
    %552 = vmatpush1.bf16.msra.mxu0 %v523
    %553 = vmatprep.subr.bf16.mxu0 0
    %554 = vmatpush1.bf16.msra.mxu0 %v524
    %555 = vmatprep.subr.bf16.mxu0 0
    %556 = vmatpush1.bf16.msra.mxu0 %v525
    %557 = vmatprep.subr.bf16.mxu0 0
    %558 = vmatpush1.bf16.msra.mxu0 %v526
    %559 = vmatprep.subr.bf16.mxu0 0
    %560 = vmatpush1.bf16.msra.mxu0 %v527
    %561 = vmatprep.subr.bf16.mxu0 0
    %562 = vmatpush1.bf16.msra.mxu0 %v528
    %563 = vmatprep.subr.bf16.mxu0 0
    %564 = vmatpush1.bf16.msra.mxu0 %v529
    %565 = vmatprep.subr.bf16.mxu0 0
    %566 = vmatpush1.bf16.msra.mxu0 %v530
    %567 = vmatprep.subr.bf16.mxu0 0
    %568 = vmatpush1.bf16.msra.mxu0 %v531
    %569 = vmatprep.subr.bf16.mxu0 0
    %570 = vmatpush1.bf16.msra.mxu0 %v532
    %571 = vmatprep.subr.bf16.mxu0 0
    %572 = vmatpush1.bf16.msra.mxu0 %v533
    %573 = vmatprep.subr.bf16.mxu0 0
    %574 = vmatpush1.bf16.msra.mxu0 %v534
    %575 = vmatprep.subr.bf16.mxu0 0
    %576 = vmatpush1.bf16.msra.mxu0 %v549
    %577 = vmatprep.subr.bf16.mxu0 0
    %578 = vmatpush1.bf16.msra.mxu0 0
    %579 = vmatprep.subr.bf16.mxu0 0
    %580 = vmatpush1.bf16.msra.mxu0 0
    %581 = vmatprep.subr.bf16.mxu0 0
    %582 = vmatpush1.bf16.msra.mxu0 0
    %583 = vmatprep.mubr.bf16.mxu0 %v545
    %584 = vmatmul.mubr.bf16.gmra.mrb[0].mxu0 %v496
    %v585 = vpop.f32.mrb[0].mxu0
    %v586 = vadd.f32 %v541, %v585
    %v587 = vpop.f32.mrb[0].mxu0
    %v588 = vpop.f32.mrb[0].mxu0
    %v589 = vpop.f32.mrb[0].mxu0
    %590 = vdwg.mxu0
    %v591 = vmax.f32 %v586, 0.0
    %v592 = vld [vmem:[#allocation10] sm:$0xff]
    %v593 = vld [vmem:[#allocation10 + $0x8] sm:$0xff]
    %v594 = vld [vmem:[#allocation10 + $0x10] sm:$0xff]
    %v595 = vld [vmem:[#allocation10 + $0x18] sm:$0xff]
    %v596 = vld [vmem:[#allocation10 + $0x20] sm:$0xff]
    %v597 = vld [vmem:[#allocation10 + $0x28] sm:$0xff]
    %v598 = vld [vmem:[#allocation10 + $0x30] sm:$0xff]
    %v599 = vld [vmem:[#allocation10 + $0x38] sm:$0xff]
    %v600 = vld [vmem:[#allocation10 + $0x40] sm:$0xff]
    %v601 = vld [vmem:[#allocation10 + $0x48] sm:$0xff]
    %v602 = vld [vmem:[#allocation10 + $0x50] sm:$0xff]
    %v603 = vld [vmem:[#allocation10 + $0x58] sm:$0xff]
    %v604 = vld [vmem:[#allocation10 + $0x60] sm:$0xff]
    %v605 = vld [vmem:[#allocation10 + $0x68] sm:$0xff]
    %v606 = vld [vmem:[#allocation10 + $0x70] sm:$0xff]
    %v607 = vld [vmem:[#allocation10 + $0x78] sm:$0xff]
    %v608 = vld [vmem:[#allocation10 + $0x80] sm:$0xff]
    %v609 = vld [vmem:[#allocation10 + $0x88] sm:$0xff]
    %v610 = vld [vmem:[#allocation10 + $0x90] sm:$0xff]
    %v611 = vld [vmem:[#allocation10 + $0x98] sm:$0xff]
    %v612 = vld [vmem:[#allocation10 + $0xa0] sm:$0xff]
    %v613 = vld [vmem:[#allocation10 + $0xa8] sm:$0xff]
    %v614 = vld [vmem:[#allocation10 + $0xb0] sm:$0xff]
    %v615 = vld [vmem:[#allocation10 + $0xb8] sm:$0xff]
    %v616 = vld [vmem:[#allocation10 + $0xc0] sm:$0xff]
    %v617 = vld [vmem:[#allocation10 + $0xc8] sm:$0xff]
    %v618 = vld [vmem:[#allocation10 + $0xd0] sm:$0xff]
    %v619 = vld [vmem:[#allocation10 + $0xd8] sm:$0xff]
    %v620 = vld [vmem:[#allocation10 + $0xe0] sm:$0xff]
    %v621 = vld [vmem:[#allocation10 + $0xe8] sm:$0xff]
    %v622 = vld [vmem:[#allocation10 + $0xf0] sm:$0xff]
    %v623 = vld [vmem:[#allocation10 + $0xf8] sm:$0xff]
    %v624 = vpack.c.bf16 %v593, %v592
    %v625 = vpack.c.bf16 %v595, %v594
    %v626 = vpack.c.bf16 %v597, %v596
    %v627 = vpack.c.bf16 %v599, %v598
    %v628 = vpack.c.bf16 %v601, %v600
    %v629 = vpack.c.bf16 %v603, %v602
    %v630 = vpack.c.bf16 %v605, %v604
    %v631 = vpack.c.bf16 %v607, %v606
    %v632 = vpack.c.bf16 %v609, %v608
    %v633 = vpack.c.bf16 %v611, %v610
    %v634 = vpack.c.bf16 %v613, %v612
    %v635 = vpack.c.bf16 %v615, %v614
    %v636 = vpack.c.bf16 %v617, %v616
    %v637 = vpack.c.bf16 %v619, %v618
    %v638 = vpack.c.bf16 %v621, %v620
    %v639 = vpack.c.bf16 %v623, %v622
    %v640 = vpack.c.bf16 %v493, %v493
    %v641 = vpack.c.bf16 %v591, %v591
    %642 = vmatprep.subr.bf16.mxu0 0
    %643 = vmatpush1.bf16.msra.mxu0 %v632
    %644 = vmatprep.subr.bf16.mxu0 0
    %645 = vmatpush1.bf16.msra.mxu0 %v633
    %646 = vmatprep.subr.bf16.mxu0 0
    %647 = vmatpush1.bf16.msra.mxu0 %v634
    %648 = vmatprep.subr.bf16.mxu0 0
    %649 = vmatpush1.bf16.msra.mxu0 %v635
    %650 = vmatprep.subr.bf16.mxu0 0
    %651 = vmatpush1.bf16.msra.mxu0 %v636
    %652 = vmatprep.subr.bf16.mxu0 0
    %653 = vmatpush1.bf16.msra.mxu0 %v637
    %654 = vmatprep.subr.bf16.mxu0 0
    %655 = vmatpush1.bf16.msra.mxu0 %v638
    %656 = vmatprep.subr.bf16.mxu0 0
    %657 = vmatpush1.bf16.msra.mxu0 %v639
    %658 = vmatprep.subr.bf16.mxu0 0
    %659 = vmatpush1.bf16.msra.mxu0 0
    %660 = vmatprep.subr.bf16.mxu0 0
    %661 = vmatpush1.bf16.msra.mxu0 0
    %662 = vmatprep.subr.bf16.mxu0 0
    %663 = vmatpush1.bf16.msra.mxu0 0
    %664 = vmatprep.subr.bf16.mxu0 0
    %665 = vmatpush1.bf16.msra.mxu0 0
    %666 = vmatprep.subr.bf16.mxu0 0
    %667 = vmatpush1.bf16.msra.mxu0 0
    %668 = vmatprep.subr.bf16.mxu0 0
    %669 = vmatpush1.bf16.msra.mxu0 0
    %670 = vmatprep.subr.bf16.mxu0 0
    %671 = vmatpush1.bf16.msra.mxu0 0
    %672 = vmatprep.subr.bf16.mxu0 0
    %673 = vmatpush1.bf16.msra.mxu0 0
    %674 = vmatprep.mubr.bf16.mxu0 0
    %675 = vmatmul.mubr.bf16.gmra.mrb[0].mxu0 %v641
    %v676 = vpop.f32.mrb[0].mxu0
    %v677 = vadd.f32 0.0, %v676
    %v678 = vpop.f32.mrb[0].mxu0
    %v679 = vpop.f32.mrb[0].mxu0
    %v680 = vpop.f32.mrb[0].mxu0
    %681 = vdwg.mxu0
    %682 = vmatprep.subr.bf16.mxu0 0
    %683 = vmatpush1.bf16.msra.mxu0 %v624
    %684 = vmatprep.subr.bf16.mxu0 0
    %685 = vmatpush1.bf16.msra.mxu0 %v625
    %686 = vmatprep.subr.bf16.mxu0 0
    %687 = vmatpush1.bf16.msra.mxu0 %v626
    %688 = vmatprep.subr.bf16.mxu0 0
    %689 = vmatpush1.bf16.msra.mxu0 %v627
    %690 = vmatprep.subr.bf16.mxu0 0
    %691 = vmatpush1.bf16.msra.mxu0 %v628
    %692 = vmatprep.subr.bf16.mxu0 0
    %693 = vmatpush1.bf16.msra.mxu0 %v629
    %694 = vmatprep.subr.bf16.mxu0 0
    %695 = vmatpush1.bf16.msra.mxu0 %v630
    %696 = vmatprep.subr.bf16.mxu0 0
    %697 = vmatpush1.bf16.msra.mxu0 %v631
    %698 = vmatprep.subr.bf16.mxu0 0
    %699 = vmatpush1.bf16.msra.mxu0 0
    %700 = vmatprep.subr.bf16.mxu0 0
    %701 = vmatpush1.bf16.msra.mxu0 0
    %702 = vmatprep.subr.bf16.mxu0 0
    %703 = vmatpush1.bf16.msra.mxu0 0
    %704 = vmatprep.subr.bf16.mxu0 0
    %705 = vmatpush1.bf16.msra.mxu0 0
    %706 = vmatprep.subr.bf16.mxu0 0
    %707 = vmatpush1.bf16.msra.mxu0 0
    %708 = vmatprep.subr.bf16.mxu0 0
    %709 = vmatpush1.bf16.msra.mxu0 0
    %710 = vmatprep.subr.bf16.mxu0 0
    %711 = vmatpush1.bf16.msra.mxu0 0
    %712 = vmatprep.subr.bf16.mxu0 0
    %713 = vmatpush1.bf16.msra.mxu0 0
    %714 = vmatprep.mubr.bf16.mxu0 0
    %715 = vmatmul.mubr.bf16.gmra.mrb[0].mxu0 %v640
    %v716 = vpop.f32.mrb[0].mxu0
    %v717 = vadd.f32 %v677, %v716
    %v718 = vpop.f32.mrb[0].mxu0
    %v719 = vpop.f32.mrb[0].mxu0
    %v720 = vpop.f32.mrb[0].mxu0
    %721 = vdwg.mxu0
    %v722 = vld [vmem:[%s7] sm:$0x1]
    %v724 = vlaneseq
    %v725 = vshrl.u32 %v724, 7
    %v726 = vsub.s32 0, %v725
    %v727 = vrot.slane %v722, %v726
    %v729 = vadd.f32 %v717, %v727
    %v730 = vmax.f32 %v729, 0.0
    %v731 = vpack.c.bf16 %v730, %v730
    %v732 = vld [vmem:[#allocation11] sm:$0xff]
    %v733 = vld [vmem:[#allocation11 + $0x8] sm:$0xff]
    %v734 = vld [vmem:[#allocation11 + $0x10] sm:$0xff]
    %v735 = vld [vmem:[#allocation11 + $0x18] sm:$0xff]
    %v736 = vld [vmem:[#allocation11 + $0x20] sm:$0xff]
    %v737 = vld [vmem:[#allocation11 + $0x28] sm:$0xff]
    %v738 = vld [vmem:[#allocation11 + $0x30] sm:$0xff]
    %v739 = vld [vmem:[#allocation11 + $0x38] sm:$0xff]
    %v740 = vld [vmem:[#allocation11 + $0x40] sm:$0xff]
    %v741 = vld [vmem:[#allocation11 + $0x48] sm:$0xff]
    %v742 = vld [vmem:[#allocation11 + $0x50] sm:$0xff]
    %v743 = vld [vmem:[#allocation11 + $0x58] sm:$0xff]
    %v744 = vld [vmem:[#allocation11 + $0x60] sm:$0xff]
    %v745 = vld [vmem:[#allocation11 + $0x68] sm:$0xff]
    %v746 = vld [vmem:[#allocation11 + $0x70] sm:$0xff]
    %v747 = vld [vmem:[#allocation11 + $0x78] sm:$0xff]
    %v748 = vpack.c.bf16 %v733, %v732
    %v749 = vpack.c.bf16 %v735, %v734
    %v750 = vpack.c.bf16 %v737, %v736
    %v751 = vpack.c.bf16 %v739, %v738
    %v752 = vpack.c.bf16 %v741, %v740
    %v753 = vpack.c.bf16 %v743, %v742
    %v754 = vpack.c.bf16 %v745, %v744
    %v755 = vpack.c.bf16 %v747, %v746
    %v756 = vld [vmem:[%s9] sm:$0x1]
    %v758 = vlaneseq
    %v759 = vshrl.u32 %v758, 7
    %v760 = vsub.s32 0, %v759
    %v761 = vrot.slane %v756, %v760
    %763 = vmatprep.subr.bf16.mxu0 0
    %764 = vmatpush1.bf16.msra.mxu0 %v748
    %765 = vmatprep.subr.bf16.mxu0 0
    %766 = vmatpush1.bf16.msra.mxu0 %v749
    %767 = vmatprep.subr.bf16.mxu0 0
    %768 = vmatpush1.bf16.msra.mxu0 %v750
    %769 = vmatprep.subr.bf16.mxu0 0
    %770 = vmatpush1.bf16.msra.mxu0 %v751
    %771 = vmatprep.subr.bf16.mxu0 0
    %772 = vmatpush1.bf16.msra.mxu0 %v752
    %773 = vmatprep.subr.bf16.mxu0 0
    %774 = vmatpush1.bf16.msra.mxu0 %v753
    %775 = vmatprep.subr.bf16.mxu0 0
    %776 = vmatpush1.bf16.msra.mxu0 %v754
    %777 = vmatprep.subr.bf16.mxu0 0
    %778 = vmatpush1.bf16.msra.mxu0 %v755
    %779 = vmatprep.subr.bf16.mxu0 0
    %780 = vmatpush1.bf16.msra.mxu0 0
    %781 = vmatprep.subr.bf16.mxu0 0
    %782 = vmatpush1.bf16.msra.mxu0 0
    %783 = vmatprep.subr.bf16.mxu0 0
    %784 = vmatpush1.bf16.msra.mxu0 0
    %785 = vmatprep.subr.bf16.mxu0 0
    %786 = vmatpush1.bf16.msra.mxu0 0
    %787 = vmatprep.subr.bf16.mxu0 0
    %788 = vmatpush1.bf16.msra.mxu0 0
    %789 = vmatprep.subr.bf16.mxu0 0
    %790 = vmatpush1.bf16.msra.mxu0 0
    %791 = vmatprep.subr.bf16.mxu0 0
    %792 = vmatpush1.bf16.msra.mxu0 0
    %793 = vmatprep.subr.bf16.mxu0 0
    %794 = vmatpush1.bf16.msra.mxu0 0
    %795 = vmatprep.mubr.bf16.mxu0 0
    %796 = vmatmul.mubr.bf16.gmra.mrb[0].mxu0 %v731
    %v797 = vpop.f32.mrb[0].mxu0
    %v798 = vadd.f32 %v761, %v797
    %v799 = vpop.f32.mrb[0].mxu0
    %v800 = vpop.f32.mrb[0].mxu0
    %v801 = vpop.f32.mrb[0].mxu0
    %802 = vdwg.mxu0
    %v803 = vmul.f32 %v798, %v798
    %804 = vadd.xlane.f32.xlu0 %v803
    %v805 = vpop.xlane.xlu0 %804
    %v806 = vmax.f32 %v805, 1e-24
    %v807 = vrsqrt.pop %v806
    %v808 = vmul.f32 %v798, %v807
    %809 = vst [vmem:[#allocation14] sm:$0xff] %v808
    %810 = vst [vmem:[#allocation13] sm:$0xff] %v493
    %811 = vst [vmem:[#allocation13 + $0x8] sm:$0xff] %v591
    // Predicated region
    $region66: #{tpu_custom_call.1} parent=1 // pred_check
      _
    $region67: #{tpu_custom_call.1} parent=1 // pred_check_branch
      %813 = sbr.rel (0) target = $region69
    $region68: #{tpu_custom_call.1} parent=1 // pred_region
      %s815 = ssub.s32 256, 256
      %816 = vsyncadd [#allocation4], %s815
      %s818 = sshll.u32 [#allocation13], 4
      %s819 = int_to_ptr.vmem [resolvable:$true] %s818
      %821 = dma.vmem_to_hbm [thread:$0]  %s819, 256, %s10, [#allocation4]
    $region69: #{tpu_custom_call.1} parent=1 // pred_fallthru
      _
    // Predicated region
    $region70: #{tpu_custom_call.1} parent=1 // pred_check
      _
    $region71: #{tpu_custom_call.1} parent=1 // pred_check_branch
      %823 = sbr.rel (0) target = $region73
    $region72: #{tpu_custom_call.1} parent=1 // pred_region
      %s825 = ssub.s32 128, 128
      %826 = vsyncadd [#allocation15], %s825
      %s828 = sshll.u32 [#allocation14], 4
      %s829 = int_to_ptr.vmem [resolvable:$true] %s828
      %831 = dma.vmem_to_hbm [thread:$0]  %s829, 128, %s11, [#allocation15]
    $region73: #{tpu_custom_call.1} parent=1 // pred_fallthru
      _
    // Predicated region
    $region74: #{tpu_custom_call.1} parent=1 // pred_check
      _
    $region75: #{tpu_custom_call.1} parent=1 // pred_check_branch
      %833 = sbr.rel (0) target = $region77
    $region76: #{tpu_custom_call.1} parent=1 // pred_region
      %834 = dma.done [#allocation4], 256
    $region77: #{tpu_custom_call.1} parent=1 // pred_fallthru
      _
    // Predicated region
    $region78: #{tpu_custom_call.1} parent=1 // pred_check
      _
    $region79: #{tpu_custom_call.1} parent=1 // pred_check_branch
      %836 = sbr.rel (0) target = $region81
    $region80: #{tpu_custom_call.1} parent=1 // pred_region
      %837 = dma.done [#allocation15], 128
    $region81: #{tpu_custom_call.1} parent=1 // pred_fallthru
      _
    %838 = vsyncpa [#allocation3], 1
    %839 = vsyncpa [#allocation6], 1
    %840 = vsyncpa [#allocation9], 1
    %841 = vsyncpa [#allocation12], 1
    %842 = vsyncpa [#allocation4], 1
    %843 = vsyncpa [#allocation15], 1

// kernel: tpu_custom_call.1
$region0: #{tpu_custom_call.1}
  #allocation0 [shape = 'u32[]', space=smem, size = 0x4, offset = 0x4, fixed_abs, tag = 'smem constant byte address 0x4 - core index']
  #allocation1 [shape = 'u32[144,128]{1,0:T(1,128)}', space=vmem, size = 0x12000, scoped, tag = 'internal scratch']
  %s0 = inlined_call_operand.hbm [shape: f32[8,1024], index: 0, kind: input, shape index: {}]
  %s1 = inlined_call_operand.hbm [shape: f32[8,200], index: 1, kind: input, shape index: {}]
  %s2 = inlined_call_operand.hbm [shape: f32[1024,128], index: 2, kind: input, shape index: {}]
  %s3 = inlined_call_operand.vmem [shape: f32[1,128], index: 3, kind: input, shape index: {}]
  %s4 = inlined_call_operand.hbm [shape: f32[200,128], index: 4, kind: input, shape index: {}]
  %s5 = inlined_call_operand.vmem [shape: f32[1,128], index: 5, kind: input, shape index: {}]
  %s6 = inlined_call_operand.hbm [shape: f32[256,128], index: 6, kind: input, shape index: {}]
  %s7 = inlined_call_operand.vmem [shape: f32[1,128], index: 7, kind: input, shape index: {}]
  %s8 = inlined_call_operand.hbm [shape: f32[128,128], index: 8, kind: input, shape index: {}]
  %s9 = inlined_call_operand.vmem [shape: f32[1,128], index: 9, kind: input, shape index: {}]
  %s10 = inlined_call_operand.hbm [shape: f32[8,256], index: 10, kind: output, shape index: {0}]
  %s11 = inlined_call_operand.hbm [shape: f32[8,128], index: 11, kind: output, shape index: {1}]
  %12 = xla_tuple %s10, %s11
  %s13 = sld [smem:[#allocation0]]
  $region82: #{tpu_custom_call.1} parent=0
    _
  %s15 = ssub.s32 1, %s13
  %s16 = scalar_select 0, %s15, %s13
  $region1: #{tpu_custom_call.1} parent=0
    #allocation2 [shape = 'u8[32768]{0}', space=vmem, size = 0x8000, scoped, tag = 'input window, operand 0, single buffered']
    #allocation3 [shape = 's32[1]{0}', space=sflag, size = 0x4, scoped, tag = 'scoped memory for tpu_custom_call.1']
    #allocation4 [shape = 's32[1]{0}', space=sflag, size = 0x4, scoped, tag = 'scoped memory for tpu_custom_call.1']
    #allocation5 [shape = 'u8[8192]{0}', space=vmem, size = 0x2000, scoped, tag = 'input window, operand 1, single buffered']
    #allocation6 [shape = 's32[1]{0}', space=sflag, size = 0x4, scoped, tag = 'scoped memory for tpu_custom_call.1']
    #allocation7 [shape = 'u8[524288]{0}', space=vmem, size = 0x80000, scoped, tag = 'input window, operand 2, single buffered']
    #allocation8 [shape = 'u8[102400]{0}', space=vmem, size = 0x19000, scoped, tag = 'input window, operand 4, single buffered']
    #allocation9 [shape = 's32[1]{0}', space=sflag, size = 0x4, scoped, tag = 'scoped memory for tpu_custom_call.1']
    #allocation10 [shape = 'u8[131072]{0}', space=vmem, size = 0x20000, scoped, tag = 'input window, operand 6, single buffered']
    #allocation11 [shape = 'u8[65536]{0}', space=vmem, size = 0x10000, scoped, tag = 'input window, operand 8, single buffered']
    #allocation12 [shape = 's32[1]{0}', space=sflag, size = 0x4, scoped, tag = 'scoped memory for tpu_custom_call.1']
    #allocation13 [shape = 'u8[8192]{0}', space=vmem, size = 0x2000, scoped, tag = 'output window, operand 0, single buffered']
    #allocation14 [shape = 'u8[4096]{0}', space=vmem, size = 0x1000, scoped, tag = 'output window, operand 1, single buffered']
    #allocation15 [shape = 's32[1]{0}', space=sflag, size = 0x4, scoped, tag = 'scoped memory for tpu_custom_call.1']
    %17 = vsyncpa [#allocation3], 0
    %18 = vsyncpa [#allocation6], 0
    %19 = vsyncpa [#allocation9], 0
    %20 = vsyncpa [#allocation12], 0
    %21 = vsyncpa [#allocation4], 0
    %22 = vsyncpa [#allocation15], 0
    // Predicated region
    $region2: #{tpu_custom_call.1} parent=1 // pred_check
      _
    $region3: #{tpu_custom_call.1} parent=1 // pred_check_branch
      %24 = sbr.rel (0) target = $region5
    $region4: #{tpu_custom_call.1} parent=1 // pred_region
      %s26 = ssub.s32 1024, 1024
      %27 = vsyncadd [#allocation3], %s26
      %s29 = sshll.u32 [#allocation2], 4
      %s30 = int_to_ptr.vmem [resolvable:$true] %s29
      %32 = dma.hbm_to_vmem [thread:$0]  %s0, 1024, %s30, [#allocation3]
    $region5: #{tpu_custom_call.1} parent=1 // pred_fallthru
      _
    // Predicated region
    $region6: #{tpu_custom_call.1} parent=1 // pred_check
      _
    $region7: #{tpu_custom_call.1} parent=1 // pred_check_branch
      %34 = sbr.rel (0) target = $region9
    $region8: #{tpu_custom_call.1} parent=1 // pred_region
      %s36 = ssub.s32 256, 256
      %37 = vsyncadd [#allocation6], %s36
      %s39 = sshll.u32 [#allocation5], 4
      %s40 = int_to_ptr.vmem [resolvable:$true] %s39
      %42 = dma.hbm_to_vmem [thread:$0]  %s1, 256, %s40, [#allocation6]
    $region9: #{tpu_custom_call.1} parent=1 // pred_fallthru
      _
    // Predicated region
    $region10: #{tpu_custom_call.1} parent=1 // pred_check
      _
    $region11: #{tpu_custom_call.1} parent=1 // pred_check_branch
      %44 = sbr.rel (0) target = $region13
    $region12: #{tpu_custom_call.1} parent=1 // pred_region
      %s46 = ssub.s32 16384, 16384
      %47 = vsyncadd [#allocation6], %s46
      %s48 = sshll.u32 [#allocation7], 4
      %s49 = int_to_ptr.vmem [resolvable:$true] %s48
      %54 = dma.hbm_to_vmem [thread:$0]  %s2, 16384, %s49, [#allocation6], 128, 128, 8
    $region13: #{tpu_custom_call.1} parent=1 // pred_fallthru
      _
    // Predicated region
    $region14: #{tpu_custom_call.1} parent=1 // pred_check
      _
    $region15: #{tpu_custom_call.1} parent=1 // pred_check_branch
      %56 = sbr.rel (0) target = $region17
    $region16: #{tpu_custom_call.1} parent=1 // pred_region
      _
    $region17: #{tpu_custom_call.1} parent=1 // pred_fallthru
      _
    // Predicated region
    $region18: #{tpu_custom_call.1} parent=1 // pred_check
      _
    $region19: #{tpu_custom_call.1} parent=1 // pred_check_branch
      %58 = sbr.rel (0) target = $region21
    $region20: #{tpu_custom_call.1} parent=1 // pred_region
      %s60 = ssub.s32 3200, 3200
      %61 = vsyncadd [#allocation9], %s60
      %s62 = sshll.u32 [#allocation8], 4
      %s63 = int_to_ptr.vmem [resolvable:$true] %s62
      %68 = dma.hbm_to_vmem [thread:$0]  %s4, 3200, %s63, [#allocation9], 128, 128, 8
    $region21: #{tpu_custom_call.1} parent=1 // pred_fallthru
      _
    // Predicated region
    $region22: #{tpu_custom_call.1} parent=1 // pred_check
      _
    $region23: #{tpu_custom_call.1} parent=1 // pred_check_branch
      %70 = sbr.rel (0) target = $region25
    $region24: #{tpu_custom_call.1} parent=1 // pred_region
      _
    $region25: #{tpu_custom_call.1} parent=1 // pred_fallthru
      _
    // Predicated region
    $region26: #{tpu_custom_call.1} parent=1 // pred_check
      _
    $region27: #{tpu_custom_call.1} parent=1 // pred_check_branch
      %72 = sbr.rel (0) target = $region29
    $region28: #{tpu_custom_call.1} parent=1 // pred_region
      %s74 = ssub.s32 4096, 4096
      %75 = vsyncadd [#allocation9], %s74
      %s76 = sshll.u32 [#allocation10], 4
      %s77 = int_to_ptr.vmem [resolvable:$true] %s76
      %82 = dma.hbm_to_vmem [thread:$0]  %s6, 4096, %s77, [#allocation9], 128, 128, 8
    $region29: #{tpu_custom_call.1} parent=1 // pred_fallthru
      _
    // Predicated region
    $region30: #{tpu_custom_call.1} parent=1 // pred_check
      _
    $region31: #{tpu_custom_call.1} parent=1 // pred_check_branch
      %84 = sbr.rel (0) target = $region33
    $region32: #{tpu_custom_call.1} parent=1 // pred_region
      _
    $region33: #{tpu_custom_call.1} parent=1 // pred_fallthru
      _
    // Predicated region
    $region34: #{tpu_custom_call.1} parent=1 // pred_check
      _
    $region35: #{tpu_custom_call.1} parent=1 // pred_check_branch
      %86 = sbr.rel (0) target = $region37
    $region36: #{tpu_custom_call.1} parent=1 // pred_region
      %s88 = ssub.s32 2048, 2048
      %89 = vsyncadd [#allocation12], %s88
      %s90 = sshll.u32 [#allocation11], 4
      %s91 = int_to_ptr.vmem [resolvable:$true] %s90
      %96 = dma.hbm_to_vmem [thread:$0]  %s8, 2048, %s91, [#allocation12], 128, 128, 8
    $region37: #{tpu_custom_call.1} parent=1 // pred_fallthru
      _
    // Predicated region
    $region38: #{tpu_custom_call.1} parent=1 // pred_check
      _
    $region39: #{tpu_custom_call.1} parent=1 // pred_check_branch
      %98 = sbr.rel (0) target = $region41
    $region40: #{tpu_custom_call.1} parent=1 // pred_region
      _
    $region41: #{tpu_custom_call.1} parent=1 // pred_fallthru
      _
    // Predicated region
    $region42: #{tpu_custom_call.1} parent=1 // pred_check
      _
    $region43: #{tpu_custom_call.1} parent=1 // pred_check_branch
      %100 = sbr.rel (0) target = $region45
    $region44: #{tpu_custom_call.1} parent=1 // pred_region
      %101 = dma.done [#allocation3], 1024
    $region45: #{tpu_custom_call.1} parent=1 // pred_fallthru
      _
    // Predicated region
    $region46: #{tpu_custom_call.1} parent=1 // pred_check
      _
    $region47: #{tpu_custom_call.1} parent=1 // pred_check_branch
      %103 = sbr.rel (0) target = $region49
    $region48: #{tpu_custom_call.1} parent=1 // pred_region
      %104 = dma.done [#allocation6], 256
    $region49: #{tpu_custom_call.1} parent=1 // pred_fallthru
      _
    // Predicated region
    $region50: #{tpu_custom_call.1} parent=1 // pred_check
      _
    $region51: #{tpu_custom_call.1} parent=1 // pred_check_branch
      %106 = sbr.rel (0) target = $region53
    $region52: #{tpu_custom_call.1} parent=1 // pred_region
      %107 = dma.done [#allocation6], 16384
    $region53: #{tpu_custom_call.1} parent=1 // pred_fallthru
      _
    // Predicated region
    $region54: #{tpu_custom_call.1} parent=1 // pred_check
      _
    $region55: #{tpu_custom_call.1} parent=1 // pred_check_branch
      %109 = sbr.rel (0) target = $region57
    $region56: #{tpu_custom_call.1} parent=1 // pred_region
      %110 = dma.done [#allocation9], 3200
    $region57: #{tpu_custom_call.1} parent=1 // pred_fallthru
      _
    // Predicated region
    $region58: #{tpu_custom_call.1} parent=1 // pred_check
      _
    $region59: #{tpu_custom_call.1} parent=1 // pred_check_branch
      %112 = sbr.rel (0) target = $region61
    $region60: #{tpu_custom_call.1} parent=1 // pred_region
      %113 = dma.done [#allocation9], 4096
    $region61: #{tpu_custom_call.1} parent=1 // pred_fallthru
      _
    // Predicated region
    $region62: #{tpu_custom_call.1} parent=1 // pred_check
      _
    $region63: #{tpu_custom_call.1} parent=1 // pred_check_branch
      %115 = sbr.rel (0) target = $region65
    $region64: #{tpu_custom_call.1} parent=1 // pred_region
      %116 = dma.done [#allocation12], 2048
    $region65: #{tpu_custom_call.1} parent=1 // pred_fallthru
      _
    %v118 = vld [vmem:[#allocation2] sm:$0xff]
    %v119 = vld [vmem:[#allocation2 + $0x8] sm:$0xff]
    %v120 = vld [vmem:[#allocation2 + $0x10] sm:$0xff]
    %v121 = vld [vmem:[#allocation2 + $0x18] sm:$0xff]
    %v122 = vld [vmem:[#allocation2 + $0x20] sm:$0xff]
    %v123 = vld [vmem:[#allocation2 + $0x28] sm:$0xff]
    %v124 = vld [vmem:[#allocation2 + $0x30] sm:$0xff]
    %v125 = vld [vmem:[#allocation2 + $0x38] sm:$0xff]
    %v126 = vpack.c.bf16 %v118, %v118
    %v127 = vpack.c.bf16 %v119, %v119
    %v128 = vpack.c.bf16 %v120, %v120
    %v129 = vpack.c.bf16 %v121, %v121
    %v130 = vpack.c.bf16 %v122, %v122
    %v131 = vpack.c.bf16 %v123, %v123
    %v132 = vpack.c.bf16 %v124, %v124
    %v133 = vpack.c.bf16 %v125, %v125
    %v134 = vld [vmem:[#allocation7] sm:$0xff]
    %v135 = vld [vmem:[#allocation7 + $0x8] sm:$0xff]
    %v136 = vld [vmem:[#allocation7 + $0x10] sm:$0xff]
    %v137 = vld [vmem:[#allocation7 + $0x18] sm:$0xff]
    %v138 = vld [vmem:[#allocation7 + $0x20] sm:$0xff]
    %v139 = vld [vmem:[#allocation7 + $0x28] sm:$0xff]
    %v140 = vld [vmem:[#allocation7 + $0x30] sm:$0xff]
    %v141 = vld [vmem:[#allocation7 + $0x38] sm:$0xff]
    %v142 = vld [vmem:[#allocation7 + $0x40] sm:$0xff]
    %v143 = vld [vmem:[#allocation7 + $0x48] sm:$0xff]
    %v144 = vld [vmem:[#allocation7 + $0x50] sm:$0xff]
    %v145 = vld [vmem:[#allocation7 + $0x58] sm:$0xff]
    %v146 = vld [vmem:[#allocation7 + $0x60] sm:$0xff]
    %v147 = vld [vmem:[#allocation7 + $0x68] sm:$0xff]
    %v148 = vld [vmem:[#allocation7 + $0x70] sm:$0xff]
    %v149 = vld [vmem:[#allocation7 + $0x78] sm:$0xff]
    %v150 = vld [vmem:[#allocation7 + $0x80] sm:$0xff]
    %v151 = vld [vmem:[#allocation7 + $0x88] sm:$0xff]
    %v152 = vld [vmem:[#allocation7 + $0x90] sm:$0xff]
    %v153 = vld [vmem:[#allocation7 + $0x98] sm:$0xff]
    %v154 = vld [vmem:[#allocation7 + $0xa0] sm:$0xff]
    %v155 = vld [vmem:[#allocation7 + $0xa8] sm:$0xff]
    %v156 = vld [vmem:[#allocation7 + $0xb0] sm:$0xff]
    %v157 = vld [vmem:[#allocation7 + $0xb8] sm:$0xff]
    %v158 = vld [vmem:[#allocation7 + $0xc0] sm:$0xff]
    %v159 = vld [vmem:[#allocation7 + $0xc8] sm:$0xff]
    %v160 = vld [vmem:[#allocation7 + $0xd0] sm:$0xff]
    %v161 = vld [vmem:[#allocation7 + $0xd8] sm:$0xff]
    %v162 = vld [vmem:[#allocation7 + $0xe0] sm:$0xff]
    %v163 = vld [vmem:[#allocation7 + $0xe8] sm:$0xff]
    %v164 = vld [vmem:[#allocation7 + $0xf0] sm:$0xff]
    %v165 = vld [vmem:[#allocation7 + $0xf8] sm:$0xff]
    %v166 = vld [vmem:[#allocation7 + $0x100] sm:$0xff]
    %v167 = vld [vmem:[#allocation7 + $0x108] sm:$0xff]
    %v168 = vld [vmem:[#allocation7 + $0x110] sm:$0xff]
    %v169 = vld [vmem:[#allocation7 + $0x118] sm:$0xff]
    %v170 = vld [vmem:[#allocation7 + $0x120] sm:$0xff]
    %v171 = vld [vmem:[#allocation7 + $0x128] sm:$0xff]
    %v172 = vld [vmem:[#allocation7 + $0x130] sm:$0xff]
    %v173 = vld [vmem:[#allocation7 + $0x138] sm:$0xff]
    %v174 = vld [vmem:[#allocation7 + $0x140] sm:$0xff]
    %v175 = vld [vmem:[#allocation7 + $0x148] sm:$0xff]
    %v176 = vld [vmem:[#allocation7 + $0x150] sm:$0xff]
    %v177 = vld [vmem:[#allocation7 + $0x158] sm:$0xff]
    %v178 = vld [vmem:[#allocation7 + $0x160] sm:$0xff]
    %v179 = vld [vmem:[#allocation7 + $0x168] sm:$0xff]
    %v180 = vld [vmem:[#allocation7 + $0x170] sm:$0xff]
    %v181 = vld [vmem:[#allocation7 + $0x178] sm:$0xff]
    %v182 = vld [vmem:[#allocation7 + $0x180] sm:$0xff]
    %v183 = vld [vmem:[#allocation7 + $0x188] sm:$0xff]
    %v184 = vld [vmem:[#allocation7 + $0x190] sm:$0xff]
    %v185 = vld [vmem:[#allocation7 + $0x198] sm:$0xff]
    %v186 = vld [vmem:[#allocation7 + $0x1a0] sm:$0xff]
    %v187 = vld [vmem:[#allocation7 + $0x1a8] sm:$0xff]
    %v188 = vld [vmem:[#allocation7 + $0x1b0] sm:$0xff]
    %v189 = vld [vmem:[#allocation7 + $0x1b8] sm:$0xff]
    %v190 = vld [vmem:[#allocation7 + $0x1c0] sm:$0xff]
    %v191 = vld [vmem:[#allocation7 + $0x1c8] sm:$0xff]
    %v192 = vld [vmem:[#allocation7 + $0x1d0] sm:$0xff]
    %v193 = vld [vmem:[#allocation7 + $0x1d8] sm:$0xff]
    %v194 = vld [vmem:[#allocation7 + $0x1e0] sm:$0xff]
    %v195 = vld [vmem:[#allocation7 + $0x1e8] sm:$0xff]
    %v196 = vld [vmem:[#allocation7 + $0x1f0] sm:$0xff]
    %v197 = vld [vmem:[#allocation7 + $0x1f8] sm:$0xff]
    %v198 = vld [vmem:[#allocation7 + $0x200] sm:$0xff]
    %v199 = vld [vmem:[#allocation7 + $0x208] sm:$0xff]
    %v200 = vld [vmem:[#allocation7 + $0x210] sm:$0xff]
    %v201 = vld [vmem:[#allocation7 + $0x218] sm:$0xff]
    %v202 = vld [vmem:[#allocation7 + $0x220] sm:$0xff]
    %v203 = vld [vmem:[#allocation7 + $0x228] sm:$0xff]
    %v204 = vld [vmem:[#allocation7 + $0x230] sm:$0xff]
    %v205 = vld [vmem:[#allocation7 + $0x238] sm:$0xff]
    %v206 = vld [vmem:[#allocation7 + $0x240] sm:$0xff]
    %v207 = vld [vmem:[#allocation7 + $0x248] sm:$0xff]
    %v208 = vld [vmem:[#allocation7 + $0x250] sm:$0xff]
    %v209 = vld [vmem:[#allocation7 + $0x258] sm:$0xff]
    %v210 = vld [vmem:[#allocation7 + $0x260] sm:$0xff]
    %v211 = vld [vmem:[#allocation7 + $0x268] sm:$0xff]
    %v212 = vld [vmem:[#allocation7 + $0x270] sm:$0xff]
    %v213 = vld [vmem:[#allocation7 + $0x278] sm:$0xff]
    %v214 = vld [vmem:[#allocation7 + $0x280] sm:$0xff]
    %v215 = vld [vmem:[#allocation7 + $0x288] sm:$0xff]
    %v216 = vld [vmem:[#allocation7 + $0x290] sm:$0xff]
    %v217 = vld [vmem:[#allocation7 + $0x298] sm:$0xff]
    %v218 = vld [vmem:[#allocation7 + $0x2a0] sm:$0xff]
    %v219 = vld [vmem:[#allocation7 + $0x2a8] sm:$0xff]
    %v220 = vld [vmem:[#allocation7 + $0x2b0] sm:$0xff]
    %v221 = vld [vmem:[#allocation7 + $0x2b8] sm:$0xff]
    %v222 = vld [vmem:[#allocation7 + $0x2c0] sm:$0xff]
    %v223 = vld [vmem:[#allocation7 + $0x2c8] sm:$0xff]
    %v224 = vld [vmem:[#allocation7 + $0x2d0] sm:$0xff]
    %v225 = vld [vmem:[#allocation7 + $0x2d8] sm:$0xff]
    %v226 = vld [vmem:[#allocation7 + $0x2e0] sm:$0xff]
    %v227 = vld [vmem:[#allocation7 + $0x2e8] sm:$0xff]
    %v228 = vld [vmem:[#allocation7 + $0x2f0] sm:$0xff]
    %v229 = vld [vmem:[#allocation7 + $0x2f8] sm:$0xff]
    %v230 = vld [vmem:[#allocation7 + $0x300] sm:$0xff]
    %v231 = vld [vmem:[#allocation7 + $0x308] sm:$0xff]
    %v232 = vld [vmem:[#allocation7 + $0x310] sm:$0xff]
    %v233 = vld [vmem:[#allocation7 + $0x318] sm:$0xff]
    %v234 = vld [vmem:[#allocation7 + $0x320] sm:$0xff]
    %v235 = vld [vmem:[#allocation7 + $0x328] sm:$0xff]
    %v236 = vld [vmem:[#allocation7 + $0x330] sm:$0xff]
    %v237 = vld [vmem:[#allocation7 + $0x338] sm:$0xff]
    %v238 = vld [vmem:[#allocation7 + $0x340] sm:$0xff]
    %v239 = vld [vmem:[#allocation7 + $0x348] sm:$0xff]
    %v240 = vld [vmem:[#allocation7 + $0x350] sm:$0xff]
    %v241 = vld [vmem:[#allocation7 + $0x358] sm:$0xff]
    %v242 = vld [vmem:[#allocation7 + $0x360] sm:$0xff]
    %v243 = vld [vmem:[#allocation7 + $0x368] sm:$0xff]
    %v244 = vld [vmem:[#allocation7 + $0x370] sm:$0xff]
    %v245 = vld [vmem:[#allocation7 + $0x378] sm:$0xff]
    %v246 = vld [vmem:[#allocation7 + $0x380] sm:$0xff]
    %v247 = vld [vmem:[#allocation7 + $0x388] sm:$0xff]
    %v248 = vld [vmem:[#allocation7 + $0x390] sm:$0xff]
    %v249 = vld [vmem:[#allocation7 + $0x398] sm:$0xff]
    %v250 = vld [vmem:[#allocation7 + $0x3a0] sm:$0xff]
    %v251 = vld [vmem:[#allocation7 + $0x3a8] sm:$0xff]
    %v252 = vld [vmem:[#allocation7 + $0x3b0] sm:$0xff]
    %v253 = vld [vmem:[#allocation7 + $0x3b8] sm:$0xff]
    %v254 = vld [vmem:[#allocation7 + $0x3c0] sm:$0xff]
    %v255 = vld [vmem:[#allocation7 + $0x3c8] sm:$0xff]
    %v256 = vld [vmem:[#allocation7 + $0x3d0] sm:$0xff]
    %v257 = vld [vmem:[#allocation7 + $0x3d8] sm:$0xff]
    %v258 = vld [vmem:[#allocation7 + $0x3e0] sm:$0xff]
    %v259 = vld [vmem:[#allocation7 + $0x3e8] sm:$0xff]
    %v260 = vld [vmem:[#allocation7 + $0x3f0] sm:$0xff]
    %v261 = vld [vmem:[#allocation7 + $0x3f8] sm:$0xff]
    %v262 = vpack.c.bf16 %v135, %v134
    %v263 = vpack.c.bf16 %v137, %v136
    %v264 = vpack.c.bf16 %v139, %v138
    %v265 = vpack.c.bf16 %v141, %v140
    %v266 = vpack.c.bf16 %v143, %v142
    %v267 = vpack.c.bf16 %v145, %v144
    %v268 = vpack.c.bf16 %v147, %v146
    %v269 = vpack.c.bf16 %v149, %v148
    %v270 = vpack.c.bf16 %v151, %v150
    %v271 = vpack.c.bf16 %v153, %v152
    %v272 = vpack.c.bf16 %v155, %v154
    %v273 = vpack.c.bf16 %v157, %v156
    %v274 = vpack.c.bf16 %v159, %v158
    %v275 = vpack.c.bf16 %v161, %v160
    %v276 = vpack.c.bf16 %v163, %v162
    %v277 = vpack.c.bf16 %v165, %v164
    %v278 = vpack.c.bf16 %v167, %v166
    %v279 = vpack.c.bf16 %v169, %v168
    %v280 = vpack.c.bf16 %v171, %v170
    %v281 = vpack.c.bf16 %v173, %v172
    %v282 = vpack.c.bf16 %v175, %v174
    %v283 = vpack.c.bf16 %v177, %v176
    %v284 = vpack.c.bf16 %v179, %v178
    %v285 = vpack.c.bf16 %v181, %v180
    %v286 = vpack.c.bf16 %v183, %v182
    %v287 = vpack.c.bf16 %v185, %v184
    %v288 = vpack.c.bf16 %v187, %v186
    %v289 = vpack.c.bf16 %v189, %v188
    %v290 = vpack.c.bf16 %v191, %v190
    %v291 = vpack.c.bf16 %v193, %v192
    %v292 = vpack.c.bf16 %v195, %v194
    %v293 = vpack.c.bf16 %v197, %v196
    %v294 = vpack.c.bf16 %v199, %v198
    %v295 = vpack.c.bf16 %v201, %v200
    %v296 = vpack.c.bf16 %v203, %v202
    %v297 = vpack.c.bf16 %v205, %v204
    %v298 = vpack.c.bf16 %v207, %v206
    %v299 = vpack.c.bf16 %v209, %v208
    %v300 = vpack.c.bf16 %v211, %v210
    %v301 = vpack.c.bf16 %v213, %v212
    %v302 = vpack.c.bf16 %v215, %v214
    %v303 = vpack.c.bf16 %v217, %v216
    %v304 = vpack.c.bf16 %v219, %v218
    %v305 = vpack.c.bf16 %v221, %v220
    %v306 = vpack.c.bf16 %v223, %v222
    %v307 = vpack.c.bf16 %v225, %v224
    %v308 = vpack.c.bf16 %v227, %v226
    %v309 = vpack.c.bf16 %v229, %v228
    %v310 = vpack.c.bf16 %v231, %v230
    %v311 = vpack.c.bf16 %v233, %v232
    %v312 = vpack.c.bf16 %v235, %v234
    %v313 = vpack.c.bf16 %v237, %v236
    %v314 = vpack.c.bf16 %v239, %v238
    %v315 = vpack.c.bf16 %v241, %v240
    %v316 = vpack.c.bf16 %v243, %v242
    %v317 = vpack.c.bf16 %v245, %v244
    %v318 = vpack.c.bf16 %v247, %v246
    %v319 = vpack.c.bf16 %v249, %v248
    %v320 = vpack.c.bf16 %v251, %v250
    %v321 = vpack.c.bf16 %v253, %v252
    %v322 = vpack.c.bf16 %v255, %v254
    %v323 = vpack.c.bf16 %v257, %v256
    %v324 = vpack.c.bf16 %v259, %v258
    %v325 = vpack.c.bf16 %v261, %v260
    %v326 = vld [vmem:[%s3] sm:$0x1]
    %v328 = vlaneseq
    %v329 = vshrl.u32 %v328, 7
    %v330 = vsub.s32 0, %v329
    %v331 = vrot.slane %v326, %v330
    %333 = vmatprep.subr.bf16.mxu0 0
    %334 = vmatpush1.bf16.msra.mxu0 %v262
    %335 = vmatprep.subr.bf16.mxu0 0
    %336 = vmatpush1.bf16.msra.mxu0 %v263
    %337 = vmatprep.subr.bf16.mxu0 0
    %338 = vmatpush1.bf16.msra.mxu0 %v264
    %339 = vmatprep.subr.bf16.mxu0 0
    %340 = vmatpush1.bf16.msra.mxu0 %v265
    %341 = vmatprep.subr.bf16.mxu0 0
    %342 = vmatpush1.bf16.msra.mxu0 %v266
    %343 = vmatprep.subr.bf16.mxu0 0
    %344 = vmatpush1.bf16.msra.mxu0 %v267
    %345 = vmatprep.subr.bf16.mxu0 0
    %346 = vmatpush1.bf16.msra.mxu0 %v268
    %347 = vmatprep.subr.bf16.mxu0 0
    %348 = vmatpush1.bf16.msra.mxu0 %v269
    %349 = vmatprep.subr.bf16.mxu0 0
    %350 = vmatpush1.bf16.msra.mxu0 %v270
    %351 = vmatprep.subr.bf16.mxu0 0
    %352 = vmatpush1.bf16.msra.mxu0 %v271
    %353 = vmatprep.subr.bf16.mxu0 0
    %354 = vmatpush1.bf16.msra.mxu0 %v272
    %355 = vmatprep.subr.bf16.mxu0 0
    %356 = vmatpush1.bf16.msra.mxu0 %v273
    %357 = vmatprep.subr.bf16.mxu0 0
    %358 = vmatpush1.bf16.msra.mxu0 %v274
    %359 = vmatprep.subr.bf16.mxu0 0
    %360 = vmatpush1.bf16.msra.mxu0 %v275
    %361 = vmatprep.subr.bf16.mxu0 0
    %362 = vmatpush1.bf16.msra.mxu0 %v276
    %363 = vmatprep.subr.bf16.mxu0 0
    %364 = vmatpush1.bf16.msra.mxu0 %v277
    %365 = vmatprep.mubr.bf16.mxu0 %v127
    %366 = vmatmul.mubr.bf16.gmra.mrb[0].mxu0 %v126
    %v367 = vpop.f32.mrb[0].mxu0
    %v368 = vadd.f32 %v331, %v367
    %v369 = vpop.f32.mrb[0].mxu0
    %v370 = vpop.f32.mrb[0].mxu0
    %v371 = vpop.f32.mrb[0].mxu0
    %372 = vdwg.mxu0
    %373 = vmatprep.subr.bf16.mxu0 0
    %374 = vmatpush1.bf16.msra.mxu0 %v278
    %375 = vmatprep.subr.bf16.mxu0 0
    %376 = vmatpush1.bf16.msra.mxu0 %v279
    %377 = vmatprep.subr.bf16.mxu0 0
    %378 = vmatpush1.bf16.msra.mxu0 %v280
    %379 = vmatprep.subr.bf16.mxu0 0
    %380 = vmatpush1.bf16.msra.mxu0 %v281
    %381 = vmatprep.subr.bf16.mxu0 0
    %382 = vmatpush1.bf16.msra.mxu0 %v282
    %383 = vmatprep.subr.bf16.mxu0 0
    %384 = vmatpush1.bf16.msra.mxu0 %v283
    %385 = vmatprep.subr.bf16.mxu0 0
    %386 = vmatpush1.bf16.msra.mxu0 %v284
    %387 = vmatprep.subr.bf16.mxu0 0
    %388 = vmatpush1.bf16.msra.mxu0 %v285
    %389 = vmatprep.subr.bf16.mxu0 0
    %390 = vmatpush1.bf16.msra.mxu0 %v286
    %391 = vmatprep.subr.bf16.mxu0 0
    %392 = vmatpush1.bf16.msra.mxu0 %v287
    %393 = vmatprep.subr.bf16.mxu0 0
    %394 = vmatpush1.bf16.msra.mxu0 %v288
    %395 = vmatprep.subr.bf16.mxu0 0
    %396 = vmatpush1.bf16.msra.mxu0 %v289
    %397 = vmatprep.subr.bf16.mxu0 0
    %398 = vmatpush1.bf16.msra.mxu0 %v290
    %399 = vmatprep.subr.bf16.mxu0 0
    %400 = vmatpush1.bf16.msra.mxu0 %v291
    %401 = vmatprep.subr.bf16.mxu0 0
    %402 = vmatpush1.bf16.msra.mxu0 %v292
    %403 = vmatprep.subr.bf16.mxu0 0
    %404 = vmatpush1.bf16.msra.mxu0 %v293
    %405 = vmatprep.mubr.bf16.mxu0 %v129
    %406 = vmatmul.mubr.bf16.gmra.mrb[0].mxu0 %v128
    %v407 = vpop.f32.mrb[0].mxu0
    %v408 = vadd.f32 %v368, %v407
    %v409 = vpop.f32.mrb[0].mxu0
    %v410 = vpop.f32.mrb[0].mxu0
    %v411 = vpop.f32.mrb[0].mxu0
    %412 = vdwg.mxu0
    %413 = vmatprep.subr.bf16.mxu0 0
    %414 = vmatpush1.bf16.msra.mxu0 %v294
    %415 = vmatprep.subr.bf16.mxu0 0
    %416 = vmatpush1.bf16.msra.mxu0 %v295
    %417 = vmatprep.subr.bf16.mxu0 0
    %418 = vmatpush1.bf16.msra.mxu0 %v296
    %419 = vmatprep.subr.bf16.mxu0 0
    %420 = vmatpush1.bf16.msra.mxu0 %v297
    %421 = vmatprep.subr.bf16.mxu0 0
    %422 = vmatpush1.bf16.msra.mxu0 %v298
    %423 = vmatprep.subr.bf16.mxu0 0
    %424 = vmatpush1.bf16.msra.mxu0 %v299
    %425 = vmatprep.subr.bf16.mxu0 0
    %426 = vmatpush1.bf16.msra.mxu0 %v300
    %427 = vmatprep.subr.bf16.mxu0 0
    %428 = vmatpush1.bf16.msra.mxu0 %v301
    %429 = vmatprep.subr.bf16.mxu0 0
    %430 = vmatpush1.bf16.msra.mxu0 %v302
    %431 = vmatprep.subr.bf16.mxu0 0
    %432 = vmatpush1.bf16.msra.mxu0 %v303
    %433 = vmatprep.subr.bf16.mxu0 0
    %434 = vmatpush1.bf16.msra.mxu0 %v304
    %435 = vmatprep.subr.bf16.mxu0 0
    %436 = vmatpush1.bf16.msra.mxu0 %v305
    %437 = vmatprep.subr.bf16.mxu0 0
    %438 = vmatpush1.bf16.msra.mxu0 %v306
    %439 = vmatprep.subr.bf16.mxu0 0
    %440 = vmatpush1.bf16.msra.mxu0 %v307
    %441 = vmatprep.subr.bf16.mxu0 0
    %442 = vmatpush1.bf16.msra.mxu0 %v308
    %443 = vmatprep.subr.bf16.mxu0 0
    %444 = vmatpush1.bf16.msra.mxu0 %v309
    %445 = vmatprep.mubr.bf16.mxu0 %v131
    %446 = vmatmul.mubr.bf16.gmra.mrb[0].mxu0 %v130
    %v447 = vpop.f32.mrb[0].mxu0
    %v448 = vadd.f32 %v408, %v447
    %v449 = vpop.f32.mrb[0].mxu0
    %v450 = vpop.f32.mrb[0].mxu0
    %v451 = vpop.f32.mrb[0].mxu0
    %452 = vdwg.mxu0
    %453 = vmatprep.subr.bf16.mxu0 0
    %454 = vmatpush1.bf16.msra.mxu0 %v310
    %455 = vmatprep.subr.bf16.mxu0 0
    %456 = vmatpush1.bf16.msra.mxu0 %v311
    %457 = vmatprep.subr.bf16.mxu0 0
    %458 = vmatpush1.bf16.msra.mxu0 %v312
    %459 = vmatprep.subr.bf16.mxu0 0
    %460 = vmatpush1.bf16.msra.mxu0 %v313
    %461 = vmatprep.subr.bf16.mxu0 0
    %462 = vmatpush1.bf16.msra.mxu0 %v314
    %463 = vmatprep.subr.bf16.mxu0 0
    %464 = vmatpush1.bf16.msra.mxu0 %v315
    %465 = vmatprep.subr.bf16.mxu0 0
    %466 = vmatpush1.bf16.msra.mxu0 %v316
    %467 = vmatprep.subr.bf16.mxu0 0
    %468 = vmatpush1.bf16.msra.mxu0 %v317
    %469 = vmatprep.subr.bf16.mxu0 0
    %470 = vmatpush1.bf16.msra.mxu0 %v318
    %471 = vmatprep.subr.bf16.mxu0 0
    %472 = vmatpush1.bf16.msra.mxu0 %v319
    %473 = vmatprep.subr.bf16.mxu0 0
    %474 = vmatpush1.bf16.msra.mxu0 %v320
    %475 = vmatprep.subr.bf16.mxu0 0
    %476 = vmatpush1.bf16.msra.mxu0 %v321
    %477 = vmatprep.subr.bf16.mxu0 0
    %478 = vmatpush1.bf16.msra.mxu0 %v322
    %479 = vmatprep.subr.bf16.mxu0 0
    %480 = vmatpush1.bf16.msra.mxu0 %v323
    %481 = vmatprep.subr.bf16.mxu0 0
    %482 = vmatpush1.bf16.msra.mxu0 %v324
    %483 = vmatprep.subr.bf16.mxu0 0
    %484 = vmatpush1.bf16.msra.mxu0 %v325
    %485 = vmatprep.mubr.bf16.mxu0 %v133
    %486 = vmatmul.mubr.bf16.gmra.mrb[0].mxu0 %v132
    %v487 = vpop.f32.mrb[0].mxu0
    %v488 = vadd.f32 %v448, %v487
    %v489 = vpop.f32.mrb[0].mxu0
    %v490 = vpop.f32.mrb[0].mxu0
    %v491 = vpop.f32.mrb[0].mxu0
    %492 = vdwg.mxu0
    %v493 = vmax.f32 %v488, 0.0
    %v494 = vld [vmem:[#allocation5] sm:$0xff]
    %v495 = vld [vmem:[#allocation5 + $0x8] sm:$0xff]
    %v496 = vpack.c.bf16 %v494, %v494
    %v497 = vpack.c.bf16 %v495, %v495
    %v498 = vld [vmem:[#allocation8] sm:$0xff]
    %v499 = vld [vmem:[#allocation8 + $0x8] sm:$0xff]
    %v500 = vld [vmem:[#allocation8 + $0x10] sm:$0xff]
    %v501 = vld [vmem:[#allocation8 + $0x18] sm:$0xff]
    %v502 = vld [vmem:[#allocation8 + $0x20] sm:$0xff]
    %v503 = vld [vmem:[#allocation8 + $0x28] sm:$0xff]
    %v504 = vld [vmem:[#allocation8 + $0x30] sm:$0xff]
    %v505 = vld [vmem:[#allocation8 + $0x38] sm:$0xff]
    %v506 = vld [vmem:[#allocation8 + $0x40] sm:$0xff]
    %v507 = vld [vmem:[#allocation8 + $0x48] sm:$0xff]
    %v508 = vld [vmem:[#allocation8 + $0x50] sm:$0xff]
    %v509 = vld [vmem:[#allocation8 + $0x58] sm:$0xff]
    %v510 = vld [vmem:[#allocation8 + $0x60] sm:$0xff]
    %v511 = vld [vmem:[#allocation8 + $0x68] sm:$0xff]
    %v512 = vld [vmem:[#allocation8 + $0x70] sm:$0xff]
    %v513 = vld [vmem:[#allocation8 + $0x78] sm:$0xff]
    %v514 = vld [vmem:[#allocation8 + $0x80] sm:$0xff]
    %v515 = vld [vmem:[#allocation8 + $0x88] sm:$0xff]
    %v516 = vld [vmem:[#allocation8 + $0x90] sm:$0xff]
    %v517 = vld [vmem:[#allocation8 + $0x98] sm:$0xff]
    %v518 = vld [vmem:[#allocation8 + $0xa0] sm:$0xff]
    %v519 = vld [vmem:[#allocation8 + $0xa8] sm:$0xff]
    %v520 = vld [vmem:[#allocation8 + $0xb0] sm:$0xff]
    %v521 = vld [vmem:[#allocation8 + $0xb8] sm:$0xff]
    %v522 = vld [vmem:[#allocation8 + $0xc0] sm:$0xff]
    %v523 = vpack.c.bf16 %v499, %v498
    %v524 = vpack.c.bf16 %v501, %v500
    %v525 = vpack.c.bf16 %v503, %v502
    %v526 = vpack.c.bf16 %v505, %v504
    %v527 = vpack.c.bf16 %v507, %v506
    %v528 = vpack.c.bf16 %v509, %v508
    %v529 = vpack.c.bf16 %v511, %v510
    %v530 = vpack.c.bf16 %v513, %v512
    %v531 = vpack.c.bf16 %v515, %v514
    %v532 = vpack.c.bf16 %v517, %v516
    %v533 = vpack.c.bf16 %v519, %v518
    %v534 = vpack.c.bf16 %v521, %v520
    %v535 = vpack.c.bf16 %v522, %v522
    %v536 = vld [vmem:[%s5] sm:$0x1]
    %v538 = vlaneseq
    %v539 = vshrl.u32 %v538, 7
    %v540 = vsub.s32 0, %v539
    %v541 = vrot.slane %v536, %v540
    %vm543 = vcmask 588800
    %v545 = vsel %vm543, %v497, 0
    %vm547 = vcmask 1043456
    %v549 = vsel %vm547, %v535, 0
    %551 = vmatprep.subr.bf16.mxu0 0
    %552 = vmatpush1.bf16.msra.mxu0 %v523
    %553 = vmatprep.subr.bf16.mxu0 0
    %554 = vmatpush1.bf16.msra.mxu0 %v524
    %555 = vmatprep.subr.bf16.mxu0 0
    %556 = vmatpush1.bf16.msra.mxu0 %v525
    %557 = vmatprep.subr.bf16.mxu0 0
    %558 = vmatpush1.bf16.msra.mxu0 %v526
    %559 = vmatprep.subr.bf16.mxu0 0
    %560 = vmatpush1.bf16.msra.mxu0 %v527
    %561 = vmatprep.subr.bf16.mxu0 0
    %562 = vmatpush1.bf16.msra.mxu0 %v528
    %563 = vmatprep.subr.bf16.mxu0 0
    %564 = vmatpush1.bf16.msra.mxu0 %v529
    %565 = vmatprep.subr.bf16.mxu0 0
    %566 = vmatpush1.bf16.msra.mxu0 %v530
    %567 = vmatprep.subr.bf16.mxu0 0
    %568 = vmatpush1.bf16.msra.mxu0 %v531
    %569 = vmatprep.subr.bf16.mxu0 0
    %570 = vmatpush1.bf16.msra.mxu0 %v532
    %571 = vmatprep.subr.bf16.mxu0 0
    %572 = vmatpush1.bf16.msra.mxu0 %v533
    %573 = vmatprep.subr.bf16.mxu0 0
    %574 = vmatpush1.bf16.msra.mxu0 %v534
    %575 = vmatprep.subr.bf16.mxu0 0
    %576 = vmatpush1.bf16.msra.mxu0 %v549
    %577 = vmatprep.subr.bf16.mxu0 0
    %578 = vmatpush1.bf16.msra.mxu0 0
    %579 = vmatprep.subr.bf16.mxu0 0
    %580 = vmatpush1.bf16.msra.mxu0 0
    %581 = vmatprep.subr.bf16.mxu0 0
    %582 = vmatpush1.bf16.msra.mxu0 0
    %583 = vmatprep.mubr.bf16.mxu0 %v545
    %584 = vmatmul.mubr.bf16.gmra.mrb[0].mxu0 %v496
    %v585 = vpop.f32.mrb[0].mxu0
    %v586 = vadd.f32 %v541, %v585
    %v587 = vpop.f32.mrb[0].mxu0
    %v588 = vpop.f32.mrb[0].mxu0
    %v589 = vpop.f32.mrb[0].mxu0
    %590 = vdwg.mxu0
    %v591 = vmax.f32 %v586, 0.0
    %v592 = vld [vmem:[#allocation10] sm:$0xff]
    %v593 = vld [vmem:[#allocation10 + $0x8] sm:$0xff]
    %v594 = vld [vmem:[#allocation10 + $0x10] sm:$0xff]
    %v595 = vld [vmem:[#allocation10 + $0x18] sm:$0xff]
    %v596 = vld [vmem:[#allocation10 + $0x20] sm:$0xff]
    %v597 = vld [vmem:[#allocation10 + $0x28] sm:$0xff]
    %v598 = vld [vmem:[#allocation10 + $0x30] sm:$0xff]
    %v599 = vld [vmem:[#allocation10 + $0x38] sm:$0xff]
    %v600 = vld [vmem:[#allocation10 + $0x40] sm:$0xff]
    %v601 = vld [vmem:[#allocation10 + $0x48] sm:$0xff]
    %v602 = vld [vmem:[#allocation10 + $0x50] sm:$0xff]
    %v603 = vld [vmem:[#allocation10 + $0x58] sm:$0xff]
    %v604 = vld [vmem:[#allocation10 + $0x60] sm:$0xff]
    %v605 = vld [vmem:[#allocation10 + $0x68] sm:$0xff]
    %v606 = vld [vmem:[#allocation10 + $0x70] sm:$0xff]
    %v607 = vld [vmem:[#allocation10 + $0x78] sm:$0xff]
    %v608 = vld [vmem:[#allocation10 + $0x80] sm:$0xff]
    %v609 = vld [vmem:[#allocation10 + $0x88] sm:$0xff]
    %v610 = vld [vmem:[#allocation10 + $0x90] sm:$0xff]
    %v611 = vld [vmem:[#allocation10 + $0x98] sm:$0xff]
    %v612 = vld [vmem:[#allocation10 + $0xa0] sm:$0xff]
    %v613 = vld [vmem:[#allocation10 + $0xa8] sm:$0xff]
    %v614 = vld [vmem:[#allocation10 + $0xb0] sm:$0xff]
    %v615 = vld [vmem:[#allocation10 + $0xb8] sm:$0xff]
    %v616 = vld [vmem:[#allocation10 + $0xc0] sm:$0xff]
    %v617 = vld [vmem:[#allocation10 + $0xc8] sm:$0xff]
    %v618 = vld [vmem:[#allocation10 + $0xd0] sm:$0xff]
    %v619 = vld [vmem:[#allocation10 + $0xd8] sm:$0xff]
    %v620 = vld [vmem:[#allocation10 + $0xe0] sm:$0xff]
    %v621 = vld [vmem:[#allocation10 + $0xe8] sm:$0xff]
    %v622 = vld [vmem:[#allocation10 + $0xf0] sm:$0xff]
    %v623 = vld [vmem:[#allocation10 + $0xf8] sm:$0xff]
    %v624 = vpack.c.bf16 %v593, %v592
    %v625 = vpack.c.bf16 %v595, %v594
    %v626 = vpack.c.bf16 %v597, %v596
    %v627 = vpack.c.bf16 %v599, %v598
    %v628 = vpack.c.bf16 %v601, %v600
    %v629 = vpack.c.bf16 %v603, %v602
    %v630 = vpack.c.bf16 %v605, %v604
    %v631 = vpack.c.bf16 %v607, %v606
    %v632 = vpack.c.bf16 %v609, %v608
    %v633 = vpack.c.bf16 %v611, %v610
    %v634 = vpack.c.bf16 %v613, %v612
    %v635 = vpack.c.bf16 %v615, %v614
    %v636 = vpack.c.bf16 %v617, %v616
    %v637 = vpack.c.bf16 %v619, %v618
    %v638 = vpack.c.bf16 %v621, %v620
    %v639 = vpack.c.bf16 %v623, %v622
    %v640 = vpack.c.bf16 %v493, %v493
    %v641 = vpack.c.bf16 %v591, %v591
    %642 = vmatprep.subr.bf16.mxu0 0
    %643 = vmatpush1.bf16.msra.mxu0 %v632
    %644 = vmatprep.subr.bf16.mxu0 0
    %645 = vmatpush1.bf16.msra.mxu0 %v633
    %646 = vmatprep.subr.bf16.mxu0 0
    %647 = vmatpush1.bf16.msra.mxu0 %v634
    %648 = vmatprep.subr.bf16.mxu0 0
    %649 = vmatpush1.bf16.msra.mxu0 %v635
    %650 = vmatprep.subr.bf16.mxu0 0
    %651 = vmatpush1.bf16.msra.mxu0 %v636
    %652 = vmatprep.subr.bf16.mxu0 0
    %653 = vmatpush1.bf16.msra.mxu0 %v637
    %654 = vmatprep.subr.bf16.mxu0 0
    %655 = vmatpush1.bf16.msra.mxu0 %v638
    %656 = vmatprep.subr.bf16.mxu0 0
    %657 = vmatpush1.bf16.msra.mxu0 %v639
    %658 = vmatprep.subr.bf16.mxu0 0
    %659 = vmatpush1.bf16.msra.mxu0 0
    %660 = vmatprep.subr.bf16.mxu0 0
    %661 = vmatpush1.bf16.msra.mxu0 0
    %662 = vmatprep.subr.bf16.mxu0 0
    %663 = vmatpush1.bf16.msra.mxu0 0
    %664 = vmatprep.subr.bf16.mxu0 0
    %665 = vmatpush1.bf16.msra.mxu0 0
    %666 = vmatprep.subr.bf16.mxu0 0
    %667 = vmatpush1.bf16.msra.mxu0 0
    %668 = vmatprep.subr.bf16.mxu0 0
    %669 = vmatpush1.bf16.msra.mxu0 0
    %670 = vmatprep.subr.bf16.mxu0 0
    %671 = vmatpush1.bf16.msra.mxu0 0
    %672 = vmatprep.subr.bf16.mxu0 0
    %673 = vmatpush1.bf16.msra.mxu0 0
    %674 = vmatprep.mubr.bf16.mxu0 0
    %675 = vmatmul.mubr.bf16.gmra.mrb[0].mxu0 %v641
    %v676 = vpop.f32.mrb[0].mxu0
    %v677 = vadd.f32 0.0, %v676
    %v678 = vpop.f32.mrb[0].mxu0
    %v679 = vpop.f32.mrb[0].mxu0
    %v680 = vpop.f32.mrb[0].mxu0
    %681 = vdwg.mxu0
    %682 = vmatprep.subr.bf16.mxu0 0
    %683 = vmatpush1.bf16.msra.mxu0 %v624
    %684 = vmatprep.subr.bf16.mxu0 0
    %685 = vmatpush1.bf16.msra.mxu0 %v625
    %686 = vmatprep.subr.bf16.mxu0 0
    %687 = vmatpush1.bf16.msra.mxu0 %v626
    %688 = vmatprep.subr.bf16.mxu0 0
    %689 = vmatpush1.bf16.msra.mxu0 %v627
    %690 = vmatprep.subr.bf16.mxu0 0
    %691 = vmatpush1.bf16.msra.mxu0 %v628
    %692 = vmatprep.subr.bf16.mxu0 0
    %693 = vmatpush1.bf16.msra.mxu0 %v629
    %694 = vmatprep.subr.bf16.mxu0 0
    %695 = vmatpush1.bf16.msra.mxu0 %v630
    %696 = vmatprep.subr.bf16.mxu0 0
    %697 = vmatpush1.bf16.msra.mxu0 %v631
    %698 = vmatprep.subr.bf16.mxu0 0
    %699 = vmatpush1.bf16.msra.mxu0 0
    %700 = vmatprep.subr.bf16.mxu0 0
    %701 = vmatpush1.bf16.msra.mxu0 0
    %702 = vmatprep.subr.bf16.mxu0 0
    %703 = vmatpush1.bf16.msra.mxu0 0
    %704 = vmatprep.subr.bf16.mxu0 0
    %705 = vmatpush1.bf16.msra.mxu0 0
    %706 = vmatprep.subr.bf16.mxu0 0
    %707 = vmatpush1.bf16.msra.mxu0 0
    %708 = vmatprep.subr.bf16.mxu0 0
    %709 = vmatpush1.bf16.msra.mxu0 0
    %710 = vmatprep.subr.bf16.mxu0 0
    %711 = vmatpush1.bf16.msra.mxu0 0
    %712 = vmatprep.subr.bf16.mxu0 0
    %713 = vmatpush1.bf16.msra.mxu0 0
    %714 = vmatprep.mubr.bf16.mxu0 0
    %715 = vmatmul.mubr.bf16.gmra.mrb[0].mxu0 %v640
    %v716 = vpop.f32.mrb[0].mxu0
    %v717 = vadd.f32 %v677, %v716
    %v718 = vpop.f32.mrb[0].mxu0
    %v719 = vpop.f32.mrb[0].mxu0
    %v720 = vpop.f32.mrb[0].mxu0
    %721 = vdwg.mxu0
    %v722 = vld [vmem:[%s7] sm:$0x1]
    %v724 = vlaneseq
    %v725 = vshrl.u32 %v724, 7
    %v726 = vsub.s32 0, %v725
    %v727 = vrot.slane %v722, %v726
    %v729 = vadd.f32 %v717, %v727
    %v730 = vmax.f32 %v729, 0.0
    %v731 = vpack.c.bf16 %v730, %v730
    %v732 = vld [vmem:[#allocation11] sm:$0xff]
    %v733 = vld [vmem:[#allocation11 + $0x8] sm:$0xff]
    %v734 = vld [vmem:[#allocation11 + $0x10] sm:$0xff]
    %v735 = vld [vmem:[#allocation11 + $0x18] sm:$0xff]
    %v736 = vld [vmem:[#allocation11 + $0x20] sm:$0xff]
    %v737 = vld [vmem:[#allocation11 + $0x28] sm:$0xff]
    %v738 = vld [vmem:[#allocation11 + $0x30] sm:$0xff]
    %v739 = vld [vmem:[#allocation11 + $0x38] sm:$0xff]
    %v740 = vld [vmem:[#allocation11 + $0x40] sm:$0xff]
    %v741 = vld [vmem:[#allocation11 + $0x48] sm:$0xff]
    %v742 = vld [vmem:[#allocation11 + $0x50] sm:$0xff]
    %v743 = vld [vmem:[#allocation11 + $0x58] sm:$0xff]
    %v744 = vld [vmem:[#allocation11 + $0x60] sm:$0xff]
    %v745 = vld [vmem:[#allocation11 + $0x68] sm:$0xff]
    %v746 = vld [vmem:[#allocation11 + $0x70] sm:$0xff]
    %v747 = vld [vmem:[#allocation11 + $0x78] sm:$0xff]
    %v748 = vpack.c.bf16 %v733, %v732
    %v749 = vpack.c.bf16 %v735, %v734
    %v750 = vpack.c.bf16 %v737, %v736
    %v751 = vpack.c.bf16 %v739, %v738
    %v752 = vpack.c.bf16 %v741, %v740
    %v753 = vpack.c.bf16 %v743, %v742
    %v754 = vpack.c.bf16 %v745, %v744
    %v755 = vpack.c.bf16 %v747, %v746
    %v756 = vld [vmem:[%s9] sm:$0x1]
    %v758 = vlaneseq
    %v759 = vshrl.u32 %v758, 7
    %v760 = vsub.s32 0, %v759
    %v761 = vrot.slane %v756, %v760
    %763 = vmatprep.subr.bf16.mxu0 0
    %764 = vmatpush1.bf16.msra.mxu0 %v748
    %765 = vmatprep.subr.bf16.mxu0 0
    %766 = vmatpush1.bf16.msra.mxu0 %v749
    %767 = vmatprep.subr.bf16.mxu0 0
    %768 = vmatpush1.bf16.msra.mxu0 %v750
    %769 = vmatprep.subr.bf16.mxu0 0
    %770 = vmatpush1.bf16.msra.mxu0 %v751
    %771 = vmatprep.subr.bf16.mxu0 0
    %772 = vmatpush1.bf16.msra.mxu0 %v752
    %773 = vmatprep.subr.bf16.mxu0 0
    %774 = vmatpush1.bf16.msra.mxu0 %v753
    %775 = vmatprep.subr.bf16.mxu0 0
    %776 = vmatpush1.bf16.msra.mxu0 %v754
    %777 = vmatprep.subr.bf16.mxu0 0
    %778 = vmatpush1.bf16.msra.mxu0 %v755
    %779 = vmatprep.subr.bf16.mxu0 0
    %780 = vmatpush1.bf16.msra.mxu0 0
    %781 = vmatprep.subr.bf16.mxu0 0
    %782 = vmatpush1.bf16.msra.mxu0 0
    %783 = vmatprep.subr.bf16.mxu0 0
    %784 = vmatpush1.bf16.msra.mxu0 0
    %785 = vmatprep.subr.bf16.mxu0 0
    %786 = vmatpush1.bf16.msra.mxu0 0
    %787 = vmatprep.subr.bf16.mxu0 0
    %788 = vmatpush1.bf16.msra.mxu0 0
    %789 = vmatprep.subr.bf16.mxu0 0
    %790 = vmatpush1.bf16.msra.mxu0 0
    %791 = vmatprep.subr.bf16.mxu0 0
    %792 = vmatpush1.bf16.msra.mxu0 0
    %793 = vmatprep.subr.bf16.mxu0 0
    %794 = vmatpush1.bf16.msra.mxu0 0
    %795 = vmatprep.mubr.bf16.mxu0 0
    %796 = vmatmul.mubr.bf16.gmra.mrb[0].mxu0 %v731
    %v797 = vpop.f32.mrb[0].mxu0
    %v798 = vadd.f32 %v761, %v797
    %v799 = vpop.f32.mrb[0].mxu0
    %v800 = vpop.f32.mrb[0].mxu0
    %v801 = vpop.f32.mrb[0].mxu0
    %802 = vdwg.mxu0
    %v803 = vmul.f32 %v798, %v798
    %804 = vadd.xlane.f32.xlu0 %v803
    %v805 = vpop.xlane.xlu0 %804
    %v806 = vmax.f32 %v805, 1e-24
    %v807 = vrsqrt.pop %v806
    %v808 = vmul.f32 %v798, %v807
    %809 = vst [vmem:[#allocation14] sm:$0xff] %v808
    %810 = vst [vmem:[#allocation13] sm:$0xff] %v493
    %811 = vst [vmem:[#allocation13 + $0x8] sm:$0xff] %v591
    // Predicated region
    $region66: #{tpu_custom_call.1} parent=1 // pred_check
      _
    $region67: #{tpu_custom_call.1} parent=1 // pred_check_branch
      %813 = sbr.rel (0) target = $region69
    $region68: #{tpu_custom_call.1} parent=1 // pred_region
      %s815 = ssub.s32 256, 256
      %816 = vsyncadd [#allocation4], %s815
      %s818 = sshll.u32 [#allocation13], 4
      %s819 = int_to_ptr.vmem [resolvable:$true] %s818
      %821 = dma.vmem_to_hbm [thread:$0]  %s819, 256, %s10, [#allocation4]
    $region69: #{tpu_custom_call.1} parent=1 // pred_fallthru
      _
    // Predicated region
    $region70: #{tpu_custom_call.1} parent=1 // pred_check
      _
    $region71: #{tpu_custom_call.1} parent=1 // pred_check_branch
      %823 = sbr.rel (0) target = $region73
    $region72: #{tpu_custom_call.1} parent=1 // pred_region
      %s825 = ssub.s32 128, 128
      %826 = vsyncadd [#allocation15], %s825
      %s828 = sshll.u32 [#allocation14], 4
      %s829 = int_to_ptr.vmem [resolvable:$true] %s828
      %831 = dma.vmem_to_hbm [thread:$0]  %s829, 128, %s11, [#allocation15]
    $region73: #{tpu_custom_call.1} parent=1 // pred_fallthru
      _
    // Predicated region
    $region74: #{tpu_custom_call.1} parent=1 // pred_check
      _
    $region75: #{tpu_custom_call.1} parent=1 // pred_check_branch
      %833 = sbr.rel (0) target = $region77
    $region76: #{tpu_custom_call.1} parent=1 // pred_region
      %834 = dma.done [#allocation4], 256
    $region77: #{tpu_custom_call.1} parent=1 // pred_fallthru
      _
    // Predicated region
    $region78: #{tpu_custom_call.1} parent=1 // pred_check
      _
    $region79: #{tpu_custom_call.1} parent=1 // pred_check_branch
      %836 = sbr.rel (0) target = $region81
    $region80: #{tpu_custom_call.1} parent=1 // pred_region
      %837 = dma.done [#allocation15], 128
    $region81: #{tpu_custom_call.1} parent=1 // pred_fallthru
      _
    %838 = vsyncpa [#allocation3], 1
    %839 = vsyncpa [#allocation6], 1
    %840 = vsyncpa [#allocation9], 1
    %841 = vsyncpa [#allocation12], 1
    %842 = vsyncpa [#allocation4], 1
    %843 = vsyncpa [#allocation15], 1

</llo_original>
